<compile_context>
chip_gen: v6e
topology: v6e:2x2x1
jax: 0.10.0
libtpu: 0.0.40
codegen_flags: <defaults>
</compile_context>

<pallas_src>
import functools

import jax
import jax.numpy as jnp
from jax import lax
from jax.experimental import pallas as pl
from jax.experimental.pallas import tpu as pltpu
from jax.scipy.linalg import expm as _expm


def _round_up(v, m):
    return (v + m - 1) // m * m


def _vmem_limit_bytes():
    # v7x-safe default (64 MiB physical VMEM); bump on v5e/v6e (128 MiB physical).
    limit = 48 * 1024 * 1024
    try:
        if int(pltpu.get_tpu_info().vmem_capacity_bytes) >= 128 * 1024 * 1024:
            limit = 64 * 1024 * 1024
    except Exception:
        pass
    return limit


def _choose_block_rows(n, d, vmem_limit, fuse_expm):
    """Row-tile size from a byte budget, not a fixed row count."""
    # ~2 MiB of streamed bytes (x + r) per grid step amortizes the ~0.35 us
    # per-step pipeline overhead (for d=16 this means ~16k rows per tile).
    target = (2 * 1024 * 1024) // (2 * d * 4)
    # 2 inputs x 2 pipeline buffers x tm*d*4 must fit, leaving room for the
    # resident W copies (+ expm temporaries when fused) and the output blocks.
    reserve = 4 * d * d * 4 + (8 * d * d * 4 if fuse_expm else 0) + (1 << 20)
    budget = max(vmem_limit // 2 - reserve, 1 << 20)
    cap = budget // (2 * 2 * d * 4)
    tm = max(512, min(target, cap))
    tm = min(tm, _round_up(n, 8))
    return _round_up(max(tm, 8), 8)


def _golem_kernel(x_ref, r_ref, w_ref, part_ref, h_ref, *,
                  n, tm, d, nblk_per_core, n_squarings, n_terms, compute_h):
    c = pl.program_id(0)   # core-parallel axis (megacore on v7x)
    i = pl.program_id(1)   # sequential reduction over row tiles

    # ---- per-core init (output blocks double as accumulators) ----
    @pl.when(i == 0)
    def _init():
        part_ref[...] = jnp.zeros_like(part_ref)
        h_ref[...] = jnp.zeros_like(h_ref)

    # ---- W-only DAG penalty, once, on core 0 (overlaps next-tile DMA) ----
    if compute_h:
        @pl.when((i == 0) & (c == 0))
        def _w_terms():
            w = w_ref[...]
            # h = trace(expm(W ∘ W)) - d via scaling-and-squaring + Taylor.
            a = (w * w) * (1.0 / float(2 ** n_squarings))
            row = lax.broadcasted_iota(jnp.int32, (d, d), 0)
            col = lax.broadcasted_iota(jnp.int32, (d, d), 1)
            eye = (row == col).astype(jnp.float32)
            term = a
            acc = eye + a
            inv_fact = 1.0
            for k in range(2, n_terms + 1):      # unrolled (compile-time const)
                inv_fact /= float(k)
                term = jnp.dot(term, a, preferred_element_type=jnp.float32)
                acc = acc + term * inv_fact
            for _ in range(n_squarings):         # unrolled squarings
                acc = jnp.dot(acc, acc, preferred_element_type=jnp.float32)
            h_ref[...] = (jnp.sum((acc * eye).reshape(1, d, d),
                                  axis=(1, 2), keepdims=True) - float(d))

    # ---- streaming data term: per-column sum of squares of the SEM residual ----
    # Logical (unclamped) row offset of this tile; masks the ragged last tile
    # and any redundant (clamped) megacore iteration -> no host-side padding.
    row_start = (c * nblk_per_core + i) * tm
    rows = row_start + lax.broadcasted_iota(jnp.int32, (tm, 1), 0)
    valid = rows < n                                           # (tm, 1)

    resid = r_ref[...] - jnp.dot(x_ref[...], w_ref[...],
                                 preferred_element_type=jnp.float32)  # (tm, d)
    resid = jnp.where(valid, resid, 0.0)
    sq = resid * resid
    # Accumulate into 8 sublane groups: pure VPU adds each step; the cross-
    # sublane reduce to (d,) is deferred to the wrapper (once per call).
    part_ref[0] = part_ref[0] + jnp.sum(sq.reshape(tm // 8, 8, d), axis=0)


def golem_forward(x, r, W, prec_mat, lambda_1, lambda_2, lambda_3, p_his, *,
                  block_rows=None, n_squarings=6, n_terms=10, n_cores=2,
                  fuse_expm_max_d=512):
    """Replicates golem.forward (dagness='zheng', p_term='hard',
    equal_variances=False, weight_mat=None)."""
    n, d = x.shape
    compute_h = d <= fuse_expm_max_d
    vmem_limit = _vmem_limit_bytes()

    if block_rows is None:
        tm = _choose_block_rows(n, d, vmem_limit, compute_h)
    else:
        tm = _round_up(min(max(block_rows, 8), _round_up(n, 8)), 8)

    nblk_total = pl.cdiv(n, tm)
    nblk_per_core = pl.cdiv(nblk_total, n_cores)

    def row_map(c, i):
        blk = c * nblk_per_core + i
        # Clamp so no DMA window is ever fully out of bounds; the in-kernel row
        # mask zeroes any re-read / padded rows.
        return (jnp.minimum(blk, nblk_total - 1), 0)

    grid_spec = pltpu.PrefetchScalarGridSpec(
        num_scalar_prefetch=0,
        grid=(n_cores, nblk_per_core),
        in_specs=[
            pl.BlockSpec((tm, d), row_map),              # _input row tile
            pl.BlockSpec((tm, d), row_map),              # _reconstr row tile
            # W is resident across the whole grid.
            # TODO(synk): pipeline_mode=pl.Buffered(1) would drop the redundant
            # second buffer for this constant-index-map block (matters at large d).
            pl.BlockSpec((d, d), lambda c, i: (0, 0)),
        ],
        out_specs=(
            pl.BlockSpec((1, 8, d), lambda c, i: (c, 0, 0)),   # per-core colsq partial
            pl.BlockSpec((1, 1, 1), lambda c, i: (c, 0, 0)),   # h (core-0 row used)
        ),
    )

    expm_matmuls = (n_terms - 1 + n_squarings) if compute_h else 0
    cost = pl.CostEstimate(
        flops=2 * n * d * d + 3 * n * d + expm_matmuls * 2 * d ** 3,
        transcendentals=0,
        bytes_accessed=4 * (2 * n * d + d * d + n_cores * (8 * d + 1)),
    )

    partials, hvec = pl.pallas_call(
        functools.partial(_golem_kernel, n=n, tm=tm, d=d,
                          nblk_per_core=nblk_per_core,
                          n_squarings=n_squarings, n_terms=n_terms,
                          compute_h=compute_h),
        out_shape=(jax.ShapeDtypeStruct((n_cores, 8, d), jnp.float32),
                   jax.ShapeDtypeStruct((n_cores, 1, 1), jnp.float32)),
        grid_spec=grid_spec,
        compiler_params=pltpu.CompilerParams(
            dimension_semantics=("parallel", "arbitrary"),
            vmem_limit_bytes=vmem_limit,
        ),
        cost_estimate=cost,
    )(x, r, W)

    # Combine per-core / per-sublane-group partials; log + sum once.
    col_sq = jnp.sum(partials, axis=(0, 1))                     # (d,)
    lik_part = 0.5 * jnp.sum(jnp.log(col_sq))
    # TODO(synk): slogdet (pivoted LU) has no clean Pallas lowering; plain JAX.
    logdet = jnp.linalg.slogdet(jnp.eye(d, dtype=W.dtype) - W)[1]
    likelihood = lik_part - logdet

    # Trivial W-only elementwise reductions stay in XLA; keeps prec_mat out of
    # the kernel's VMEM budget entirely.
    l1 = jnp.sum(jnp.abs(W))
    ploss = jnp.sum(jnp.abs(W * (1.0 - prec_mat)))

    if compute_h:
        h = hvec[0, 0, 0]
    else:
        # Large-d path: keep the serial matmul chain out of the streaming kernel
        # (VMEM pressure on v7x); plain XLA expm instead.
        h = jnp.trace(_expm(W * W)) - d

    # lambda_3 schedule update happens BEFORE the score is formed (as in PyTorch).
    new_lambda_3 = jnp.where(
        (ploss > 0.99 * p_his) & (lambda_3 < 10.0), 10.0 * lambda_3, lambda_3
    )
    score = likelihood + lambda_1 * l1 + lambda_2 * h + new_lambda_3 * ploss

    return {
        "score": score,
        "likelihood": likelihood,
        "L1_penalty": l1,
        "p_loss": ploss,
        "h": h,
        "lambda_3": new_lambda_3,
        "p_his": ploss,
    }


def _reference_forward(x, r, W, prec_mat, lambda_1, lambda_2, lambda_3, p_his):
    """Pure-JAX reference (mirrors the PyTorch math)."""
    d = W.shape[0]
    resid = r - x @ W
    likelihood = 0.5 * jnp.sum(jnp.log(jnp.sum(resid**2, axis=0))) - jnp.linalg.slogdet(
        jnp.eye(d, dtype=W.dtype) - W
    )[1]
    l1 = jnp.sum(jnp.abs(W))
    ploss = jnp.sum(jnp.abs(W * (1.0 - prec_mat)))
    h = jnp.trace(_expm(W * W)) - d
    lam3 = jnp.where((ploss > 0.99 * p_his) & (lambda_3 < 10.0), 10.0 * lambda_3, lambda_3)
    return likelihood + lambda_1 * l1 + lambda_2 * h + lam3 * ploss


if __name__ == "__main__":
    # Small but multi-tile shapes: n=500 rows, d=16 variables.
    # block_rows=128 -> 4 row blocks over a (2, 2) grid (ragged last tile masked
    # in-kernel); block_rows=None exercises the auto byte-budget tiling path.
    n, d = 500, 16
    lambda_1, lambda_2, lambda_3 = 0.02, 5.0, 0.1
    p_his = 100.0  # module init value

    key = jax.random.PRNGKey(0)
    k_w, k_x, k_r, k_p = jax.random.split(key, 4)

    # Xavier-uniform init of W (as in torch.nn.init.xavier_uniform_ for (d, d)).
    bound = (6.0 / (d + d)) ** 0.5
    W = jax.random.uniform(k_w, (d, d), jnp.float32, minval=-bound, maxval=bound)

    x = jax.random.normal(k_x, (n, d), jnp.float32)          # _input
    r = jax.random.normal(k_r, (n, d), jnp.float32)          # _reconstr
    prec_mat = (jax.random.uniform(k_p, (d, d)) > 0.5).astype(jnp.float32)

    score_ref = float(
        _reference_forward(x, r, W, prec_mat, lambda_1, lambda_2, lambda_3, p_his)
    )

    for br in (128, None):
        out = golem_forward(x, r, W, prec_mat, lambda_1, lambda_2, lambda_3, p_his,
                            block_rows=br)
        out = jax.tree_util.tree_map(jax.block_until_ready, out)
        score = float(out["score"])
        assert abs(score - score_ref) <= 1e-3 * (1.0 + abs(score_ref)), (
            br, score, score_ref)

    print("KERNEL_OK")
</pallas_src>

<mosaic_0001>
module attributes {stable_mosaic.version = 11 : i64} {
  func.func @_golem_kernel(%arg0: i32, %arg1: i32, %arg2: memref<128x16xf32, #tpu.memory_space<vmem>>, %arg3: memref<128x16xf32, #tpu.memory_space<vmem>>, %arg4: memref<16x16xf32, #tpu.memory_space<vmem>>, %arg5: memref<1x8x16xf32, #tpu.memory_space<vmem>>, %arg6: memref<1x1x1xf32, #tpu.memory_space<vmem>>) attributes {dimension_semantics = [#tpu.dimension_semantics<parallel>, #tpu.dimension_semantics<arbitrary>], iteration_bounds = array<i64: 2, 2>, scalar_prefetch = 0 : i64, scratch_operands = 0 : i64, tpu.core_type = #tpu.core_type<tc>, window_params = [{transform_indices = @transform_0, window_bounds = array<i64: 128, 16>}, {transform_indices = @transform_1, window_bounds = array<i64: 128, 16>}, {pipeline_mode = #tpu.pipeline_mode<synchronous>, transform_indices = @transform_2, window_bounds = array<i64: 16, 16>}, {transform_indices = @transform_3, window_bounds = array<i64: 1, 8, 16>}, {transform_indices = @transform_4, window_bounds = array<i64: 1, 1, 1>}]} {
    %c0_i32 = arith.constant 0 : i32
    %0 = arith.cmpi eq, %arg1, %c0_i32 : i32
    %1 = arith.extui %0 : i1 to i32
    %c0_i32_0 = arith.constant 0 : i32
    %2 = arith.cmpi ne, %1, %c0_i32_0 : i32
    scf.if %2 {
      %cst_17 = arith.constant 0.000000e+00 : f32
      %34 = vector.broadcast %cst_17 : f32 to vector<1x8x16xf32>
      %c0_18 = arith.constant 0 : index
      %c0_19 = arith.constant 0 : index
      %c0_20 = arith.constant 0 : index
      %35 = vector.load %arg5[%c0_18, %c0_19, %c0_20] : memref<1x8x16xf32, #tpu.memory_space<vmem>>, vector<1x8x16xf32>
      tpu.vector_store %arg5[%c0_18, %c0_19, %c0_20], %34 {strides = array<i32>} : memref<1x8x16xf32, #tpu.memory_space<vmem>>, vector<1x8x16xf32>,
      %cst_21 = arith.constant 0.000000e+00 : f32
      %36 = vector.broadcast %cst_21 : f32 to vector<1x1x1xf32>
      %c0_22 = arith.constant 0 : index
      %c0_23 = arith.constant 0 : index
      %c0_24 = arith.constant 0 : index
      %37 = vector.load %arg6[%c0_22, %c0_23, %c0_24] : memref<1x1x1xf32, #tpu.memory_space<vmem>>, vector<1x1x1xf32>
      tpu.vector_store %arg6[%c0_22, %c0_23, %c0_24], %36 {strides = array<i32>} : memref<1x1x1xf32, #tpu.memory_space<vmem>>, vector<1x1x1xf32>,
    } else {
    }
    %c0_i32_1 = arith.constant 0 : i32
    %3 = arith.cmpi eq, %arg1, %c0_i32_1 : i32
    %c0_i32_2 = arith.constant 0 : i32
    %4 = arith.cmpi eq, %arg0, %c0_i32_2 : i32
    %5 = arith.andi %3, %4 : i1
    %6 = arith.extui %5 : i1 to i32
    %c0_i32_3 = arith.constant 0 : i32
    %7 = arith.cmpi ne, %6, %c0_i32_3 : i32
    scf.if %7 {
      %c0_17 = arith.constant 0 : index
      %c0_18 = arith.constant 0 : index
      %34 = vector.load %arg4[%c0_17, %c0_18] : memref<16x16xf32, #tpu.memory_space<vmem>>, vector<16x16xf32>
      %35 = arith.mulf %34, %34 : vector<16x16xf32>
      %cst_19 = arith.constant 1.562500e-02 : f32
      %36 = vector.broadcast %cst_19 : f32 to vector<16x16xf32>
      %37 = arith.mulf %35, %36 : vector<16x16xf32>
      %38 = tpu.iota {dimensions = array<i32: 0>} : vector<16x16xi32>
      %39 = tpu.iota {dimensions = array<i32: 1>} : vector<16x16xi32>
      %40 = arith.cmpi eq, %38, %39 : vector<16x16xi32>
      %41 = arith.extui %40 : vector<16x16xi1> to vector<16x16xi32>
      %42 = arith.sitofp %41 : vector<16x16xi32> to vector<16x16xf32>
      %43 = arith.addf %42, %37 : vector<16x16xf32>
      %cst_20 = arith.constant dense<0.000000e+00> : vector<16x16xf32>
      %44 = tpu.matmul %37, %37, %cst_20 {dimension_numbers = #tpu.dot_dimension_numbers<[1], [0], [0], [1], [0, 0, 1, 1], [], []>} : vector<16x16xf32>, vector<16x16xf32>, vector<16x16xf32> -> vector<16x16xf32>
      %cst_21 = arith.constant 5.000000e-01 : f32
      %45 = vector.broadcast %cst_21 : f32 to vector<16x16xf32>
      %46 = arith.mulf %44, %45 : vector<16x16xf32>
      %47 = arith.addf %43, %46 : vector<16x16xf32>
      %cst_22 = arith.constant dense<0.000000e+00> : vector<16x16xf32>
      %48 = tpu.matmul %44, %37, %cst_22 {dimension_numbers = #tpu.dot_dimension_numbers<[1], [0], [0], [1], [0, 0, 1, 1], [], []>} : vector<16x16xf32>, vector<16x16xf32>, vector<16x16xf32> -> vector<16x16xf32>
      %cst_23 = arith.constant 0.166666672 : f32
      %49 = vector.broadcast %cst_23 : f32 to vector<16x16xf32>
      %50 = arith.mulf %48, %49 : vector<16x16xf32>
      %51 = arith.addf %47, %50 : vector<16x16xf32>
      %cst_24 = arith.constant dense<0.000000e+00> : vector<16x16xf32>
      %52 = tpu.matmul %48, %37, %cst_24 {dimension_numbers = #tpu.dot_dimension_numbers<[1], [0], [0], [1], [0, 0, 1, 1], [], []>} : vector<16x16xf32>, vector<16x16xf32>, vector<16x16xf32> -> vector<16x16xf32>
      %cst_25 = arith.constant 0.0416666679 : f32
      %53 = vector.broadcast %cst_25 : f32 to vector<16x16xf32>
      %54 = arith.mulf %52, %53 : vector<16x16xf32>
      %55 = arith.addf %51, %54 : vector<16x16xf32>
      %cst_26 = arith.constant dense<0.000000e+00> : vector<16x16xf32>
      %56 = tpu.matmul %52, %37, %cst_26 {dimension_numbers = #tpu.dot_dimension_numbers<[1], [0], [0], [1], [0, 0, 1, 1], [], []>} : vector<16x16xf32>, vector<16x16xf32>, vector<16x16xf32> -> vector<16x16xf32>
      %cst_27 = arith.constant 0.00833333377 : f32
      %57 = vector.broadcast %cst_27 : f32 to vector<16x16xf32>
      %58 = arith.mulf %56, %57 : vector<16x16xf32>
      %59 = arith.addf %55, %58 : vector<16x16xf32>
      %cst_28 = arith.constant dense<0.000000e+00> : vector<16x16xf32>
      %60 = tpu.matmul %56, %37, %cst_28 {dimension_numbers = #tpu.dot_dimension_numbers<[1], [0], [0], [1], [0, 0, 1, 1], [], []>} : vector<16x16xf32>, vector<16x16xf32>, vector<16x16xf32> -> vector<16x16xf32>
      %cst_29 = arith.constant 0.00138888892 : f32
      %61 = vector.broadcast %cst_29 : f32 to vector<16x16xf32>
      %62 = arith.mulf %60, %61 : vector<16x16xf32>
      %63 = arith.addf %59, %62 : vector<16x16xf32>
      %cst_30 = arith.constant dense<0.000000e+00> : vector<16x16xf32>
      %64 = tpu.matmul %60, %37, %cst_30 {dimension_numbers = #tpu.dot_dimension_numbers<[1], [0], [0], [1], [0, 0, 1, 1], [], []>} : vector<16x16xf32>, vector<16x16xf32>, vector<16x16xf32> -> vector<16x16xf32>
      %cst_31 = arith.constant 1.98412701E-4 : f32
      %65 = vector.broadcast %cst_31 : f32 to vector<16x16xf32>
      %66 = arith.mulf %64, %65 : vector<16x16xf32>
      %67 = arith.addf %63, %66 : vector<16x16xf32>
      %cst_32 = arith.constant dense<0.000000e+00> : vector<16x16xf32>
      %68 = tpu.matmul %64, %37, %cst_32 {dimension_numbers = #tpu.dot_dimension_numbers<[1], [0], [0], [1], [0, 0, 1, 1], [], []>} : vector<16x16xf32>, vector<16x16xf32>, vector<16x16xf32> -> vector<16x16xf32>
      %cst_33 = arith.constant 2.48015876E-5 : f32
      %69 = vector.broadcast %cst_33 : f32 to vector<16x16xf32>
      %70 = arith.mulf %68, %69 : vector<16x16xf32>
      %71 = arith.addf %67, %70 : vector<16x16xf32>
      %cst_34 = arith.constant dense<0.000000e+00> : vector<16x16xf32>
      %72 = tpu.matmul %68, %37, %cst_34 {dimension_numbers = #tpu.dot_dimension_numbers<[1], [0], [0], [1], [0, 0, 1, 1], [], []>} : vector<16x16xf32>, vector<16x16xf32>, vector<16x16xf32> -> vector<16x16xf32>
      %cst_35 = arith.constant 2.75573188E-6 : f32
      %73 = vector.broadcast %cst_35 : f32 to vector<16x16xf32>
      %74 = arith.mulf %72, %73 : vector<16x16xf32>
      %75 = arith.addf %71, %74 : vector<16x16xf32>
      %cst_36 = arith.constant dense<0.000000e+00> : vector<16x16xf32>
      %76 = tpu.matmul %72, %37, %cst_36 {dimension_numbers = #tpu.dot_dimension_numbers<[1], [0], [0], [1], [0, 0, 1, 1], [], []>} : vector<16x16xf32>, vector<16x16xf32>, vector<16x16xf32> -> vector<16x16xf32>
      %cst_37 = arith.constant 2.755732E-7 : f32
      %77 = vector.broadcast %cst_37 : f32 to vector<16x16xf32>
      %78 = arith.mulf %76, %77 : vector<16x16xf32>
      %79 = arith.addf %75, %78 : vector<16x16xf32>
      %cst_38 = arith.constant dense<0.000000e+00> : vector<16x16xf32>
      %80 = tpu.matmul %79, %79, %cst_38 {dimension_numbers = #tpu.dot_dimension_numbers<[1], [0], [0], [1], [0, 0, 1, 1], [], []>} : vector<16x16xf32>, vector<16x16xf32>, vector<16x16xf32> -> vector<16x16xf32>
      %cst_39 = arith.constant dense<0.000000e+00> : vector<16x16xf32>
      %81 = tpu.matmul %80, %80, %cst_39 {dimension_numbers = #tpu.dot_dimension_numbers<[1], [0], [0], [1], [0, 0, 1, 1], [], []>} : vector<16x16xf32>, vector<16x16xf32>, vector<16x16xf32> -> vector<16x16xf32>
      %cst_40 = arith.constant dense<0.000000e+00> : vector<16x16xf32>
      %82 = tpu.matmul %81, %81, %cst_40 {dimension_numbers = #tpu.dot_dimension_numbers<[1], [0], [0], [1], [0, 0, 1, 1], [], []>} : vector<16x16xf32>, vector<16x16xf32>, vector<16x16xf32> -> vector<16x16xf32>
      %cst_41 = arith.constant dense<0.000000e+00> : vector<16x16xf32>
      %83 = tpu.matmul %82, %82, %cst_41 {dimension_numbers = #tpu.dot_dimension_numbers<[1], [0], [0], [1], [0, 0, 1, 1], [], []>} : vector<16x16xf32>, vector<16x16xf32>, vector<16x16xf32> -> vector<16x16xf32>
      %cst_42 = arith.constant dense<0.000000e+00> : vector<16x16xf32>
      %84 = tpu.matmul %83, %83, %cst_42 {dimension_numbers = #tpu.dot_dimension_numbers<[1], [0], [0], [1], [0, 0, 1, 1], [], []>} : vector<16x16xf32>, vector<16x16xf32>, vector<16x16xf32> -> vector<16x16xf32>
      %cst_43 = arith.constant dense<0.000000e+00> : vector<16x16xf32>
      %85 = tpu.matmul %84, %84, %cst_43 {dimension_numbers = #tpu.dot_dimension_numbers<[1], [0], [0], [1], [0, 0, 1, 1], [], []>} : vector<16x16xf32>, vector<16x16xf32>, vector<16x16xf32> -> vector<16x16xf32>
      %86 = arith.mulf %85, %42 : vector<16x16xf32>
      %87 = vector.shape_cast %86 : vector<16x16xf32> to vector<1x16x16xf32>
      %cst_44 = arith.constant dense<0.000000e+00> : vector<1xf32>
      %88 = vector.multi_reduction <add>, %87, %cst_44 [1, 2] : vector<1x16x16xf32> to vector<1xf32>
      %89 = vector.shape_cast %88 : vector<1xf32> to vector<1x1x1xf32>
      %cst_45 = arith.constant 1.600000e+01 : f32
      %90 = vector.broadcast %cst_45 : f32 to vector<1x1x1xf32>
      %91 = arith.subf %89, %90 : vector<1x1x1xf32>
      %c0_46 = arith.constant 0 : index
      %c0_47 = arith.constant 0 : index
      %c0_48 = arith.constant 0 : index
      %92 = vector.load %arg6[%c0_46, %c0_47, %c0_48] : memref<1x1x1xf32, #tpu.memory_space<vmem>>, vector<1x1x1xf32>
      tpu.vector_store %arg6[%c0_46, %c0_47, %c0_48], %91 {strides = array<i32>} : memref<1x1x1xf32, #tpu.memory_space<vmem>>, vector<1x1x1xf32>,
    } else {
    }
    %c2_i32 = arith.constant 2 : i32
    %8 = arith.muli %arg0, %c2_i32 : i32
    %9 = arith.addi %8, %arg1 : i32
    %c128_i32 = arith.constant 128 : i32
    %10 = arith.muli %9, %c128_i32 : i32
    %11 = tpu.iota {dimensions = array<i32: 0>} : vector<128x1xi32>
    %12 = vector.broadcast %10 : i32 to vector<128x1xi32>
    %13 = arith.addi %12, %11 : vector<128x1xi32>
    %c500_i32 = arith.constant 500 : i32
    %14 = vector.broadcast %c500_i32 : i32 to vector<128x1xi32>
    %15 = arith.cmpi slt, %13, %14 : vector<128x1xi32>
    %c0 = arith.constant 0 : index
    %c0_4 = arith.constant 0 : index
    %16 = vector.load %arg3[%c0, %c0_4] : memref<128x16xf32, #tpu.memory_space<vmem>>, vector<128x16xf32>
    %c0_5 = arith.constant 0 : index
    %c0_6 = arith.constant 0 : index
    %17 = vector.load %arg2[%c0_5, %c0_6] : memref<128x16xf32, #tpu.memory_space<vmem>>, vector<128x16xf32>
    %c0_7 = arith.constant 0 : index
    %c0_8 = arith.constant 0 : index
    %18 = vector.load %arg4[%c0_7, %c0_8] : memref<16x16xf32, #tpu.memory_space<vmem>>, vector<16x16xf32>
    %cst = arith.constant dense<0.000000e+00> : vector<128x16xf32>
    %19 = tpu.matmul %17, %18, %cst {dimension_numbers = #tpu.dot_dimension_numbers<[1], [0], [0], [1], [0, 0, 1, 1], [], []>} : vector<128x16xf32>, vector<16x16xf32>, vector<128x16xf32> -> vector<128x16xf32>
    %20 = arith.subf %16, %19 : vector<128x16xf32>
    %cst_9 = arith.constant 0.000000e+00 : f32
    %21 = vector.shape_cast %15 : vector<128x1xi1> to vector<128x1xi1>
    %22 = vector.broadcast %21 : vector<128x1xi1> to vector<128x16xi1>
    %23 = vector.broadcast %cst_9 : f32 to vector<128x16xf32>
    %24 = arith.select %22, %20, %23 : vector<128x16xi1>, vector<128x16xf32>
    %25 = arith.mulf %24, %24 : vector<128x16xf32>
    %c0_10 = arith.constant 0 : index
    %c0_11 = arith.constant 0 : index
    %c0_12 = arith.constant 0 : index
    %26 = vector.load %arg5[%c0_10, %c0_11, %c0_12] : memref<1x8x16xf32, #tpu.memory_space<vmem>>, vector<1x8x16xf32>
    %27 = vector.shape_cast %26 : vector<1x8x16xf32> to vector<8x16xf32>
    %28 = vector.shape_cast %25 : vector<128x16xf32> to vector<16x8x16xf32>
    %cst_13 = arith.constant dense<0.000000e+00> : vector<8x16xf32>
    %29 = vector.multi_reduction <add>, %28, %cst_13 [0] : vector<16x8x16xf32> to vector<8x16xf32>
    %30 = arith.addf %27, %29 : vector<8x16xf32>
    %c0_14 = arith.constant 0 : index
    %c0_15 = arith.constant 0 : index
    %c0_16 = arith.constant 0 : index
    %31 = vector.load %arg5[%c0_14, %c0_15, %c0_16] : memref<1x8x16xf32, #tpu.memory_space<vmem>>, vector<1x8x16xf32>
    %32 = vector.shape_cast %31 : vector<1x8x16xf32> to vector<8x16xf32>
    %33 = vector.shape_cast %30 : vector<8x16xf32> to vector<1x8x16xf32>
    tpu.vector_store %arg5[%c0_14, %c0_15, %c0_16], %33 {strides = array<i32>} : memref<1x8x16xf32, #tpu.memory_space<vmem>>, vector<1x8x16xf32>,
    return
  }
  func.func @transform_0(%arg0: i32, %arg1: i32) -> (i32, i32) {
    %c2_i32 = arith.constant 2 : i32
    %0 = arith.muli %arg0, %c2_i32 : i32
    %1 = arith.addi %0, %arg1 : i32
    %c3_i32 = arith.constant 3 : i32
    %2 = arith.minsi %1, %c3_i32 : i32
    %c0_i32 = arith.constant 0 : i32
    %c0_i32_0 = arith.constant 0 : i32
    return %2, %c0_i32 : i32, i32
  }
  func.func @transform_1(%arg0: i32, %arg1: i32) -> (i32, i32) {
    %c2_i32 = arith.constant 2 : i32
    %0 = arith.muli %arg0, %c2_i32 : i32
    %1 = arith.addi %0, %arg1 : i32
    %c3_i32 = arith.constant 3 : i32
    %2 = arith.minsi %1, %c3_i32 : i32
    %c0_i32 = arith.constant 0 : i32
    %c0_i32_0 = arith.constant 0 : i32
    return %2, %c0_i32 : i32, i32
  }
  func.func @transform_2(%arg0: i32, %arg1: i32) -> (i32, i32) {
    %c0_i32 = arith.constant 0 : i32
    %c0_i32_0 = arith.constant 0 : i32
    %c0_i32_1 = arith.constant 0 : i32
    return %c0_i32, %c0_i32_0 : i32, i32
  }
  func.func @transform_3(%arg0: i32, %arg1: i32) -> (i32, i32, i32) {
    %c0_i32 = arith.constant 0 : i32
    %c0_i32_0 = arith.constant 0 : i32
    %c0_i32_1 = arith.constant 0 : i32
    return %arg0, %c0_i32, %c0_i32_0 : i32, i32, i32
  }
  func.func @transform_4(%arg0: i32, %arg1: i32) -> (i32, i32, i32) {
    %c0_i32 = arith.constant 0 : i32
    %c0_i32_0 = arith.constant 0 : i32
    %c0_i32_1 = arith.constant 0 : i32
    return %arg0, %c0_i32, %c0_i32_0 : i32, i32, i32
  }
}

</mosaic_0001>

<llo_original>
// kernel: tpu_custom_call.1
$region0: #{tpu_custom_call.1}
  #allocation0 [shape = 'u32[]', space=smem, size = 0x4, offset = 0x4, fixed_abs, tag = 'smem constant byte address 0x4 - core index']
  #allocation1 [shape = 'u32[144,128]{1,0:T(1,128)}', space=vmem, size = 0x12000, scoped, tag = 'internal scratch']
  %s0 = inlined_call_operand.vmem [shape: f32[500,16], index: 0, kind: input, shape index: {}]
  %s1 = inlined_call_operand.vmem [shape: f32[500,16], index: 1, kind: input, shape index: {}]
  %s2 = inlined_call_operand.vmem [shape: f32[16,16], index: 2, kind: input, shape index: {}]
  %s3 = inlined_call_operand.hbm [shape: f32[2,8,16], index: 3, kind: output, shape index: {0}]
  %s4 = inlined_call_operand.vmem [shape: f32[2,1,1], index: 4, kind: output, shape index: {1}]
  %5 = xla_tuple %s3, %s4
  %s6 = sld [smem:[#allocation0]]
  $region61: #{tpu_custom_call.1} parent=0
    _
  %s8 = ssub.s32 1, %s6
  %s9 = scalar_select 0, %s8, %s6
  $region1: #{tpu_custom_call.1} parent=0
    #allocation2 [shape = 'u8[8192]{0}', space=vmem, size = 0x2000, scoped, tag = 'output window, operand 0']
    #allocation3 [shape = 's32[2]{0}', space=sflag, size = 0x8, scoped, tag = 'scoped memory for tpu_custom_call.1']
    %10 = vsyncpa [#allocation3], 0
    %s11 = scalar_lea.sflag [#allocation3], 1
    %12 = vsyncpa %s11, 0
    loop: start=0, step=1, limit=6
    $region2: #{tpu_custom_call.1} parent=1 // loop_pre_header
      _
    $region3: #{tpu_custom_call.1} parent=1 // loop_header
      %s14 = sphi 0, %s18
      %p15 = scmp.ge.s32.totalorder %s14, 6
      %s21 = sphi 0, %s33
      %s22 = sphi 0, %s29
      %s23 = sphi 0, %s21
      %s24 = sphi 0, %s22
      %s25 = sphi 0, %s23
      %s26 = sphi 0, %s24
      %s44 = sphi 0, %s46
      %s47 = sphi 0, %s44
      %s48 = sphi 0, %s47
      %s64 = sphi 0, %s48
      %s78 = sphi 0, %s80
      %s81 = sphi 0, %s78
      %s82 = sphi 0, %s81
      %s98 = sphi 0, %s82
      %s102 = sphi 0, %s102
      %s104 = sphi 0, %s102
      %s105 = sphi 0, %s104
      %s119 = sphi 0, %s105
      %s125 = sphi 0, %s127
      %s128 = sphi 0, %s125
      %s129 = sphi 0, %s128
      %s145 = sphi 0, %s129
      %s151 = sphi 0, %s153
      %s154 = sphi 0, %s151
      %s155 = sphi 0, %s154
      %s171 = sphi 0, %s155
    $region4: #{tpu_custom_call.1} parent=1 // loop_header_branch
      %17 = sbr.rel (%p15) target = $region8
    $region5: #{tpu_custom_call.1} parent=1 // loop_body
      %s19 = ssub.s32 %s14, 1
      %s20 = ssub.s32 %s14, 2
      %s27 = sadd.s32 1, %s22
      %p28 = scmp.ge.s32.totalorder %s27, 2
      %s29 = scalar_select %p28, 0, %s27
      %s30 = sadd.s32 1, %s21
      %s31 = scalar_select %p28, %s30, %s21
      %p32 = scmp.ge.s32.totalorder %s31, 2
      %s33 = scalar_select %p32, 0, %s31
      %s34 = smul.u32 %s21, 2
      %s35 = sadd.s32 %s34, %s22
      %p36 = scmp.lt.s32.totalorder %s35, 3
      %s37 = scalar_select %p36, %s35, 3
      %s38 = smul.u32 %s33, 2
      %s39 = sadd.s32 %s38, %s29
      %p40 = scmp.lt.s32.totalorder %s39, 3
      %s41 = scalar_select %p40, %s39, 3
      %s42 = ssub.s32 %s37, %s41
      %p43 = scmp.eq.s32.totalorder %s42, 0
      %s45 = sadd.s32 %s44, 1
      %s46 = scalar_select %p43, %s44, %s45
      %p49 = pneg %p43
      %p50 = scmp.eq.s32.totalorder %s14, 3
      %p51 = por %p49, %p50
      %p52 = scmp.ne.s32.totalorder %s44, %s47
      %p53 = scmp.eq.s32.totalorder %s14, 0
      %p54 = por %p52, %p53
      %p55 = scmp.ne.s32.totalorder %s44, %s47
      %p56 = scmp.eq.s32.totalorder %s19, 3
      %p57 = por %p55, %p56
      %p58 = scmp.ne.s32.totalorder %s47, %s48
      %p59 = scmp.eq.s32.totalorder %s19, 0
      %p60 = por %p58, %p59
      %p61 = scmp.ne.s32.totalorder %s47, %s48
      %p62 = scmp.eq.s32.totalorder %s20, 3
      %p63 = por %p61, %p62
      %p65 = scmp.ne.s32.totalorder %s48, %s64
      %p66 = scmp.eq.s32.totalorder %s20, 0
      %p67 = por %p65, %p66
      %s68 = smul.u32 %s21, 2
      %s69 = sadd.s32 %s68, %s22
      %p70 = scmp.lt.s32.totalorder %s69, 3
      %s71 = scalar_select %p70, %s69, 3
      %s72 = smul.u32 %s33, 2
      %s73 = sadd.s32 %s72, %s29
      %p74 = scmp.lt.s32.totalorder %s73, 3
      %s75 = scalar_select %p74, %s73, 3
      %s76 = ssub.s32 %s71, %s75
      %p77 = scmp.eq.s32.totalorder %s76, 0
      %s79 = sadd.s32 %s78, 1
      %s80 = scalar_select %p77, %s78, %s79
      %p83 = pneg %p77
      %p84 = scmp.eq.s32.totalorder %s14, 3
      %p85 = por %p83, %p84
      %p86 = scmp.ne.s32.totalorder %s78, %s81
      %p87 = scmp.eq.s32.totalorder %s14, 0
      %p88 = por %p86, %p87
      %p89 = scmp.ne.s32.totalorder %s78, %s81
      %p90 = scmp.eq.s32.totalorder %s19, 3
      %p91 = por %p89, %p90
      %p92 = scmp.ne.s32.totalorder %s81, %s82
      %p93 = scmp.eq.s32.totalorder %s19, 0
      %p94 = por %p92, %p93
      %p95 = scmp.ne.s32.totalorder %s81, %s82
      %p96 = scmp.eq.s32.totalorder %s20, 3
      %p97 = por %p95, %p96
      %p99 = scmp.ne.s32.totalorder %s82, %s98
      %p100 = scmp.eq.s32.totalorder %s20, 0
      %p101 = por %p99, %p100
      %s103 = sadd.s32 %s102, 1
      %p106 = scmp.eq.s32.totalorder %s14, 3
      %p107 = scmp.ne.s32.totalorder %s102, %s104
      %p108 = scmp.eq.s32.totalorder %s14, 0
      %p109 = por %p107, %p108
      %p110 = scmp.ne.s32.totalorder %s102, %s104
      %p111 = scmp.eq.s32.totalorder %s19, 3
      %p112 = por %p110, %p111
      %p113 = scmp.ne.s32.totalorder %s104, %s105
      %p114 = scmp.eq.s32.totalorder %s19, 0
      %p115 = por %p113, %p114
      %p116 = scmp.ne.s32.totalorder %s104, %s105
      %p117 = scmp.eq.s32.totalorder %s20, 3
      %p118 = por %p116, %p117
      %p120 = scmp.ne.s32.totalorder %s105, %s119
      %p121 = scmp.eq.s32.totalorder %s20, 0
      %p122 = por %p120, %p121
      %s123 = ssub.s32 %s21, %s33
      %p124 = scmp.eq.s32.totalorder %s123, 0
      %s126 = sadd.s32 %s125, 1
      %s127 = scalar_select %p124, %s125, %s126
      %p130 = pneg %p124
      %p131 = scmp.eq.s32.totalorder %s14, 3
      %p132 = por %p130, %p131
      %p133 = scmp.ne.s32.totalorder %s125, %s128
      %p134 = scmp.eq.s32.totalorder %s14, 0
      %p135 = por %p133, %p134
      %p136 = scmp.ne.s32.totalorder %s125, %s128
      %p137 = scmp.eq.s32.totalorder %s19, 3
      %p138 = por %p136, %p137
      %p139 = scmp.ne.s32.totalorder %s128, %s129
      %p140 = scmp.eq.s32.totalorder %s19, 0
      %p141 = por %p139, %p140
      %p142 = scmp.ne.s32.totalorder %s128, %s129
      %p143 = scmp.eq.s32.totalorder %s20, 3
      %p144 = por %p142, %p143
      %p146 = scmp.ne.s32.totalorder %s129, %s145
      %p147 = scmp.eq.s32.totalorder %s20, 0
      %p148 = por %p146, %p147
      %s149 = ssub.s32 %s21, %s33
      %p150 = scmp.eq.s32.totalorder %s149, 0
      %s152 = sadd.s32 %s151, 1
      %s153 = scalar_select %p150, %s151, %s152
      %p156 = pneg %p150
      %p157 = scmp.eq.s32.totalorder %s14, 3
      %p158 = por %p156, %p157
      %p159 = scmp.ne.s32.totalorder %s151, %s154
      %p160 = scmp.eq.s32.totalorder %s14, 0
      %p161 = por %p159, %p160
      %p162 = scmp.ne.s32.totalorder %s151, %s154
      %p163 = scmp.eq.s32.totalorder %s19, 3
      %p164 = por %p162, %p163
      %p165 = scmp.ne.s32.totalorder %s154, %s155
      %p166 = scmp.eq.s32.totalorder %s19, 0
      %p167 = por %p165, %p166
      %p168 = scmp.ne.s32.totalorder %s154, %s155
      %p169 = scmp.eq.s32.totalorder %s20, 3
      %p170 = por %p168, %p169
      %p172 = scmp.ne.s32.totalorder %s155, %s171
      %p173 = scmp.eq.s32.totalorder %s20, 0
      %p174 = por %p172, %p173
      %p175 = scmp.le.s32.totalorder 1, %s14
      %p176 = scmp.lt.s32.totalorder %s14, 5
      %p177 = pnand %p175, %p176
      %p178 = pneg %p177
      // Predicated region
      $region9: #{tpu_custom_call.1} parent=5 // pred_check
        _
      $region10: #{tpu_custom_call.1} parent=5 // pred_check_branch
        %180 = sbr.rel (%p177) target = $region12
      $region11: #{tpu_custom_call.1} parent=5 // pred_region
        %s181 = ssub.s32 %s14, 1
        // Predicated region
        $region13: #{tpu_custom_call.1} parent=11 // pred_check
          %p182 = pneg %p115
        $region14: #{tpu_custom_call.1} parent=11 // pred_check_branch
          %184 = sbr.rel (%p182) target = $region16
        $region15: #{tpu_custom_call.1} parent=11 // pred_region
          _
        $region16: #{tpu_custom_call.1} parent=11 // pred_fallthru
          _
      $region12: #{tpu_custom_call.1} parent=5 // pred_fallthru
        _
      %p185 = scmp.lt.s32.totalorder %s14, 4
      // Predicated region
      $region17: #{tpu_custom_call.1} parent=5 // pred_check
        %p186 = pneg %p185
      $region18: #{tpu_custom_call.1} parent=5 // pred_check_branch
        %188 = sbr.rel (%p186) target = $region20
      $region19: #{tpu_custom_call.1} parent=5 // pred_region
        // Predicated region
        $region21: #{tpu_custom_call.1} parent=19 // pred_check
          %p189 = pneg %p54
        $region22: #{tpu_custom_call.1} parent=19 // pred_check_branch
          %191 = sbr.rel (%p189) target = $region24
        $region23: #{tpu_custom_call.1} parent=19 // pred_region
          %s192 = smul.u32 %s21, 2
          %s193 = sadd.s32 %s192, %s22
          %p194 = scmp.lt.s32.totalorder %s193, 3
          %s195 = scalar_select %p194, %s193, 3
          %s196 = smul.u32 16, %s195
          %s197 = ssub.s32 63, %s196
          %p198 = scmp.lt.s32.totalorder %s197, 16
          %s199 = scalar_select %p198, %s197, 16
          %s200 = smul.u32 128, %s199
          %p201 = scmp.lt.s32.totalorder %s196, 62
          %s202 = scalar_select %p201, %s196, 62
          %s203 = smul.addr %s202, 8
          %s204 = scalar_lea.vmem %s0, %s203
          %s205 = smul.u32 %s21, 2
          %s206 = sadd.s32 %s205, %s22
          %p207 = scmp.lt.s32.totalorder %s206, 3
          %s208 = scalar_select %p207, %s206, 3
          %s209 = smul.u32 16, %s208
          %s210 = ssub.s32 63, %s209
          %p211 = scmp.lt.s32.totalorder %s210, 16
          %s212 = scalar_select %p211, %s210, 16
          %s213 = smul.u32 128, %s212
        $region24: #{tpu_custom_call.1} parent=19 // pred_fallthru
          _
        // Predicated region
        $region25: #{tpu_custom_call.1} parent=19 // pred_check
          %p214 = pneg %p88
        $region26: #{tpu_custom_call.1} parent=19 // pred_check_branch
          %216 = sbr.rel (%p214) target = $region28
        $region27: #{tpu_custom_call.1} parent=19 // pred_region
          %s217 = smul.u32 %s21, 2
          %s218 = sadd.s32 %s217, %s22
          %p219 = scmp.lt.s32.totalorder %s218, 3
          %s220 = scalar_select %p219, %s218, 3
          %s221 = smul.u32 16, %s220
          %s222 = ssub.s32 63, %s221
          %p223 = scmp.lt.s32.totalorder %s222, 16
          %s224 = scalar_select %p223, %s222, 16
          %s225 = smul.u32 128, %s224
          %p226 = scmp.lt.s32.totalorder %s221, 62
          %s227 = scalar_select %p226, %s221, 62
          %s228 = smul.addr %s227, 8
          %s229 = scalar_lea.vmem %s1, %s228
          %s230 = smul.u32 %s21, 2
          %s231 = sadd.s32 %s230, %s22
          %p232 = scmp.lt.s32.totalorder %s231, 3
          %s233 = scalar_select %p232, %s231, 3
          %s234 = smul.u32 16, %s233
          %s235 = ssub.s32 63, %s234
          %p236 = scmp.lt.s32.totalorder %s235, 16
          %s237 = scalar_select %p236, %s235, 16
          %s238 = smul.u32 128, %s237
        $region28: #{tpu_custom_call.1} parent=19 // pred_fallthru
          _
      $region20: #{tpu_custom_call.1} parent=5 // pred_fallthru
        _
      %p239 = scmp.le.s32.totalorder 1, %s14
      %p240 = scmp.lt.s32.totalorder %s14, 5
      %p241 = pnand %p239, %p240
      %p242 = pneg %p241
      // Predicated region
      $region29: #{tpu_custom_call.1} parent=5 // pred_check
        _
      $region30: #{tpu_custom_call.1} parent=5 // pred_check_branch
        %244 = sbr.rel (%p241) target = $region32
      $region31: #{tpu_custom_call.1} parent=5 // pred_region
        %s245 = ssub.s32 %s14, 1
        %s246 = smul.u32 %s23, 2
        %s247 = sadd.s32 %s246, %s24
        %p248 = scmp.lt.s32.totalorder %s247, 3
        %s249 = scalar_select %p248, %s247, 3
        %s250 = smul.u32 16, %s249
        %s251 = ssub.s32 63, %s250
        %p252 = scmp.lt.s32.totalorder %s251, 16
        %s253 = scalar_select %p252, %s251, 16
        %s254 = smul.u32 128, %s253
        %p255 = scmp.lt.s32.totalorder %s250, 62
        %s256 = scalar_select %p255, %s250, 62
        %s257 = smul.addr %s256, 8
        %s258 = scalar_lea.vmem %s0, %s257
        %p259 = pneg %p60
        %p260 = pneg %p57
        %s261 = smul.u32 %s23, 2
        %s262 = sadd.s32 %s261, %s24
        %p263 = scmp.lt.s32.totalorder %s262, 3
        %s264 = scalar_select %p263, %s262, 3
        %s265 = smul.u32 16, %s264
        %s266 = ssub.s32 63, %s265
        %p267 = scmp.lt.s32.totalorder %s266, 16
        %s268 = scalar_select %p267, %s266, 16
        %s269 = smul.u32 128, %s268
        %p270 = scmp.lt.s32.totalorder %s265, 62
        %s271 = scalar_select %p270, %s265, 62
        %s272 = smul.addr %s271, 8
        %s273 = scalar_lea.vmem %s1, %s272
        %p274 = pneg %p94
        %p275 = pneg %p91
        %p276 = pneg %p115
        %p277 = pneg %p112
        %p278 = pneg %p141
        %p279 = pneg %p138
        %s280 = sand.u32 %s128, 1
        %s281 = scalar_lea.sflag [#allocation3], %s280
        %s282 = sand.u32 %s128, 1
        %s283 = smul.addr %s282, 8
        %s284 = scalar_lea.vmem [#allocation2], %s283
        %p285 = pneg %p167
        %p286 = pneg %p164
        %p287 = scmp.lt.s32.totalorder %s23, 1
        %s288 = scalar_select %p287, %s23, 1
        %s289 = scalar_lea.vmem %s4, %s288
        %s290 = smul.u32 %s23, 2
        %s291 = sadd.s32 %s290, %s24
        %p292 = scmp.lt.s32.totalorder %s291, 3
        %s293 = scalar_select %p292, %s291, 3
        %s294 = smul.u32 16, %s293
        %s295 = ssub.s32 63, %s294
        %p296 = scmp.lt.s32.totalorder %s295, 16
        %s297 = scalar_select %p296, %s295, 16
        %s298 = smul.u32 128, %s297
        %p299 = scmp.lt.s32.totalorder %s294, 62
        %s300 = scalar_select %p299, %s294, 62
        %s301 = smul.addr %s300, 8
        %s302 = scalar_lea.vmem %s0, %s301
        %s303 = smul.u32 %s23, 2
        %s304 = sadd.s32 %s303, %s24
        %p305 = scmp.lt.s32.totalorder %s304, 3
        %s306 = scalar_select %p305, %s304, 3
        %s307 = smul.u32 16, %s306
        %s308 = ssub.s32 63, %s307
        %p309 = scmp.lt.s32.totalorder %s308, 16
        %s310 = scalar_select %p309, %s308, 16
        %s311 = smul.u32 128, %s310
        %s312 = smul.u32 %s23, 2
        %s313 = sadd.s32 %s312, %s24
        %p314 = scmp.lt.s32.totalorder %s313, 3
        %s315 = scalar_select %p314, %s313, 3
        %s316 = smul.u32 16, %s315
        %s317 = ssub.s32 63, %s316
        %p318 = scmp.lt.s32.totalorder %s317, 16
        %s319 = scalar_select %p318, %s317, 16
        %s320 = smul.u32 128, %s319
        %p321 = scmp.lt.s32.totalorder %s316, 62
        %s322 = scalar_select %p321, %s316, 62
        %s323 = smul.addr %s322, 8
        %s324 = scalar_lea.vmem %s1, %s323
        %s325 = smul.u32 %s23, 2
        %s326 = sadd.s32 %s325, %s24
        %p327 = scmp.lt.s32.totalorder %s326, 3
        %s328 = scalar_select %p327, %s326, 3
        %s329 = smul.u32 16, %s328
        %s330 = ssub.s32 63, %s329
        %p331 = scmp.lt.s32.totalorder %s330, 16
        %s332 = scalar_select %p331, %s330, 16
        %s333 = smul.u32 128, %s332
        %p334 = scmp.lt.s32.totalorder %s23, 1
        %s335 = scalar_select %p334, %s23, 1
        %s336 = scalar_lea.vmem %s4, %s335
        %p337 = scmp.eq.s32.totalorder %s24, 0
        // Predicated region
        $region33: #{tpu_custom_call.1} parent=31 // pred_check
          %p338 = pneg %p337
        $region34: #{tpu_custom_call.1} parent=31 // pred_check_branch
          %340 = sbr.rel (%p338) target = $region36
        $region35: #{tpu_custom_call.1} parent=31 // pred_region
          %vm341 = vcmask 130048
          %342 = vst.msk [vmem:[%s284] sm:$0xff] %vm341, 0.0
          %vm343 = vcmask 0
          %344 = vst.msk [vmem:[%s336] sm:$0x1] %vm343, 0.0
        $region36: #{tpu_custom_call.1} parent=31 // pred_fallthru
          _
        %p345 = scmp.eq.s32.totalorder %s23, 0
        %p346 = pnand %p337, %p345
        %p347 = pneg %p346
        // Predicated region
        $region37: #{tpu_custom_call.1} parent=31 // pred_check
          _
        $region38: #{tpu_custom_call.1} parent=31 // pred_check_branch
          %349 = sbr.rel (%p346) target = $region40
        $region39: #{tpu_custom_call.1} parent=31 // pred_region
          %v350 = vld [vmem:[%s2] sm:$0xff]
          %v351 = vld [vmem:[%s2 + $0x8] sm:$0xff]
          %v352 = vmul.f32 %v350, %v350
          %v353 = vmul.f32 %v351, %v351
          %v354 = vmul.f32 %v352, 0.015625
          %v355 = vmul.f32 %v353, 0.015625
          %v356 = vlaneseq
          %v357 = vshrl.u32 %v356, 7
          %v358 = vadd.s32 %v357, 8
          %v359 = vlaneseq
          %v360 = vand.u32 %v359, 127
          %vm361 = vcmp.eq.s32.totalorder %v357, %v360
          %vm362 = vcmp.eq.s32.totalorder %v358, %v360
          %v363 = vsel %vm361, 1, 0
          %v364 = vsel %vm362, 1, 0
          %v365 = vcvt.s32.f32 %v363
          %v366 = vcvt.s32.f32 %v364
          %v367 = vadd.f32 %v365, %v354
          %v368 = vadd.f32 %v366, %v355
          %vm369 = vcmask 130048
          %v371 = vsel %vm369, %v354, 0
          %v374 = vsel %vm369, %v355, 0
          %376 = vmatprep.subr.mxu0 0.0
          %377 = vmatpush1.msra.mxu0 0.0
          %378 = vmatprep.subr.mxu0 0.0
          %379 = vmatpush1.msra.mxu0 0.0
          %380 = vmatprep.subr.mxu0 0.0
          %381 = vmatpush1.msra.mxu0 0.0
          %382 = vmatprep.subr.mxu0 0.0
          %383 = vmatpush1.msra.mxu0 0.0
          %384 = vmatprep.subr.mxu0 0.0
          %385 = vmatpush1.msra.mxu0 0.0
          %386 = vmatprep.subr.mxu0 0.0
          %387 = vmatpush1.msra.mxu0 0.0
          %388 = vmatprep.subr.mxu0 0.0
          %389 = vmatpush1.msra.mxu0 0.0
          %390 = vmatprep.subr.mxu0 0.0
          %391 = vmatpush1.msra.mxu0 0.0
          %392 = vmatprep.subr.mxu0 0.0
          %393 = vmatpush1.msra.mxu0 0.0
          %394 = vmatprep.subr.mxu0 0.0
          %395 = vmatpush1.msra.mxu0 0.0
          %396 = vmatprep.subr.mxu0 0.0
          %397 = vmatpush1.msra.mxu0 0.0
          %398 = vmatprep.subr.mxu0 0.0
          %399 = vmatpush1.msra.mxu0 0.0
          %400 = vmatprep.subr.mxu0 0.0
          %401 = vmatpush1.msra.mxu0 0.0
          %402 = vmatprep.subr.mxu0 0.0
          %403 = vmatpush1.msra.mxu0 0.0
          %404 = vmatprep.subr.mxu0 0.0
          %405 = vmatpush1.msra.mxu0 %v355
          %406 = vmatprep.subr.mxu0 0.0
          %407 = vmatpush1.msra.mxu0 %v354
          %408 = vmatprep.subr.mxu0 0.0
          %409 = vmatpush2.msra.mxu0 0.0
          %410 = vmatprep.subr.mxu0 0.0
          %411 = vmatpush2.msra.mxu0 0.0
          %412 = vmatprep.subr.mxu0 0.0
          %413 = vmatpush2.msra.mxu0 0.0
          %414 = vmatprep.subr.mxu0 0.0
          %415 = vmatpush2.msra.mxu0 0.0
          %416 = vmatprep.subr.mxu0 0.0
          %417 = vmatpush2.msra.mxu0 0.0
          %418 = vmatprep.subr.mxu0 0.0
          %419 = vmatpush2.msra.mxu0 0.0
          %420 = vmatprep.subr.mxu0 0.0
          %421 = vmatpush2.msra.mxu0 0.0
          %422 = vmatprep.subr.mxu0 0.0
          %423 = vmatpush2.msra.mxu0 0.0
          %424 = vmatprep.subr.mxu0 0.0
          %425 = vmatpush2.msra.mxu0 0.0
          %426 = vmatprep.subr.mxu0 0.0
          %427 = vmatpush2.msra.mxu0 0.0
          %428 = vmatprep.subr.mxu0 0.0
          %429 = vmatpush2.msra.mxu0 0.0
          %430 = vmatprep.subr.mxu0 0.0
          %431 = vmatpush2.msra.mxu0 0.0
          %432 = vmatprep.subr.mxu0 0.0
          %433 = vmatpush2.msra.mxu0 0.0
          %434 = vmatprep.subr.mxu0 0.0
          %435 = vmatpush2.msra.mxu0 0.0
          %436 = vmatprep.subr.mxu0 0.0
          %437 = vmatpush2.msra.mxu0 0.0
          %438 = vmatprep.subr.mxu0 0.0
          %439 = vmatpush2.msra.mxu0 0.0
          %440 = vmatprep.mubr.f32.mxu0 0.0
          %441 = vmatmul.mubr.f32.gmra.mxu0 %v371
          %v442 = vpop.f32.mrf.mxu0
          %v443 = vadd.f32 0.0, %v442
          %v444 = vpop.f32.mrf.mxu0
          %445 = vmatprep.mubr.f32.mxu0 0.0
          %446 = vmatmul.mubr.f32.gmra.mxu0 %v374
          %v447 = vpop.f32.mrf.mxu0
          %v448 = vadd.f32 0.0, %v447
          %v449 = vpop.f32.mrf.mxu0
          %450 = vdwg.mxu0
          %v451 = vmul.f32 %v443, 0.5
          %v452 = vmul.f32 %v448, 0.5
          %v453 = vadd.f32 %v367, %v451
          %v454 = vadd.f32 %v368, %v452
          %v456 = vsel %vm369, %v443, 0
          %v459 = vsel %vm369, %v448, 0
          %461 = vmatprep.subr.mxu0 0.0
          %462 = vmatpush1.msra.mxu0 0.0
          %463 = vmatprep.subr.mxu0 0.0
          %464 = vmatpush1.msra.mxu0 0.0
          %465 = vmatprep.subr.mxu0 0.0
          %466 = vmatpush1.msra.mxu0 0.0
          %467 = vmatprep.subr.mxu0 0.0
          %468 = vmatpush1.msra.mxu0 0.0
          %469 = vmatprep.subr.mxu0 0.0
          %470 = vmatpush1.msra.mxu0 0.0
          %471 = vmatprep.subr.mxu0 0.0
          %472 = vmatpush1.msra.mxu0 0.0
          %473 = vmatprep.subr.mxu0 0.0
          %474 = vmatpush1.msra.mxu0 0.0
          %475 = vmatprep.subr.mxu0 0.0
          %476 = vmatpush1.msra.mxu0 0.0
          %477 = vmatprep.subr.mxu0 0.0
          %478 = vmatpush1.msra.mxu0 0.0
          %479 = vmatprep.subr.mxu0 0.0
          %480 = vmatpush1.msra.mxu0 0.0
          %481 = vmatprep.subr.mxu0 0.0
          %482 = vmatpush1.msra.mxu0 0.0
          %483 = vmatprep.subr.mxu0 0.0
          %484 = vmatpush1.msra.mxu0 0.0
          %485 = vmatprep.subr.mxu0 0.0
          %486 = vmatpush1.msra.mxu0 0.0
          %487 = vmatprep.subr.mxu0 0.0
          %488 = vmatpush1.msra.mxu0 0.0
          %489 = vmatprep.subr.mxu0 0.0
          %490 = vmatpush1.msra.mxu0 %v355
          %491 = vmatprep.subr.mxu0 0.0
          %492 = vmatpush1.msra.mxu0 %v354
          %493 = vmatprep.subr.mxu0 0.0
          %494 = vmatpush2.msra.mxu0 0.0
          %495 = vmatprep.subr.mxu0 0.0
          %496 = vmatpush2.msra.mxu0 0.0
          %497 = vmatprep.subr.mxu0 0.0
          %498 = vmatpush2.msra.mxu0 0.0
          %499 = vmatprep.subr.mxu0 0.0
          %500 = vmatpush2.msra.mxu0 0.0
          %501 = vmatprep.subr.mxu0 0.0
          %502 = vmatpush2.msra.mxu0 0.0
          %503 = vmatprep.subr.mxu0 0.0
          %504 = vmatpush2.msra.mxu0 0.0
          %505 = vmatprep.subr.mxu0 0.0
          %506 = vmatpush2.msra.mxu0 0.0
          %507 = vmatprep.subr.mxu0 0.0
          %508 = vmatpush2.msra.mxu0 0.0
          %509 = vmatprep.subr.mxu0 0.0
          %510 = vmatpush2.msra.mxu0 0.0
          %511 = vmatprep.subr.mxu0 0.0
          %512 = vmatpush2.msra.mxu0 0.0
          %513 = vmatprep.subr.mxu0 0.0
          %514 = vmatpush2.msra.mxu0 0.0
          %515 = vmatprep.subr.mxu0 0.0
          %516 = vmatpush2.msra.mxu0 0.0
          %517 = vmatprep.subr.mxu0 0.0
          %518 = vmatpush2.msra.mxu0 0.0
          %519 = vmatprep.subr.mxu0 0.0
          %520 = vmatpush2.msra.mxu0 0.0
          %521 = vmatprep.subr.mxu0 0.0
          %522 = vmatpush2.msra.mxu0 0.0
          %523 = vmatprep.subr.mxu0 0.0
          %524 = vmatpush2.msra.mxu0 0.0
          %525 = vmatprep.mubr.f32.mxu0 0.0
          %526 = vmatmul.mubr.f32.gmra.mxu0 %v456
          %v527 = vpop.f32.mrf.mxu0
          %v528 = vadd.f32 0.0, %v527
          %v529 = vpop.f32.mrf.mxu0
          %530 = vmatprep.mubr.f32.mxu0 0.0
          %531 = vmatmul.mubr.f32.gmra.mxu0 %v459
          %v532 = vpop.f32.mrf.mxu0
          %v533 = vadd.f32 0.0, %v532
          %v534 = vpop.f32.mrf.mxu0
          %535 = vdwg.mxu0
          %v536 = vmul.f32 %v528, 0.16666667
          %v537 = vmul.f32 %v533, 0.16666667
          %v538 = vadd.f32 %v453, %v536
          %v539 = vadd.f32 %v454, %v537
          %v541 = vsel %vm369, %v528, 0
          %v544 = vsel %vm369, %v533, 0
          %546 = vmatprep.subr.mxu0 0.0
          %547 = vmatpush1.msra.mxu0 0.0
          %548 = vmatprep.subr.mxu0 0.0
          %549 = vmatpush1.msra.mxu0 0.0
          %550 = vmatprep.subr.mxu0 0.0
          %551 = vmatpush1.msra.mxu0 0.0
          %552 = vmatprep.subr.mxu0 0.0
          %553 = vmatpush1.msra.mxu0 0.0
          %554 = vmatprep.subr.mxu0 0.0
          %555 = vmatpush1.msra.mxu0 0.0
          %556 = vmatprep.subr.mxu0 0.0
          %557 = vmatpush1.msra.mxu0 0.0
          %558 = vmatprep.subr.mxu0 0.0
          %559 = vmatpush1.msra.mxu0 0.0
          %560 = vmatprep.subr.mxu0 0.0
          %561 = vmatpush1.msra.mxu0 0.0
          %562 = vmatprep.subr.mxu0 0.0
          %563 = vmatpush1.msra.mxu0 0.0
          %564 = vmatprep.subr.mxu0 0.0
          %565 = vmatpush1.msra.mxu0 0.0
          %566 = vmatprep.subr.mxu0 0.0
          %567 = vmatpush1.msra.mxu0 0.0
          %568 = vmatprep.subr.mxu0 0.0
          %569 = vmatpush1.msra.mxu0 0.0
          %570 = vmatprep.subr.mxu0 0.0
          %571 = vmatpush1.msra.mxu0 0.0
          %572 = vmatprep.subr.mxu0 0.0
          %573 = vmatpush1.msra.mxu0 0.0
          %574 = vmatprep.subr.mxu0 0.0
          %575 = vmatpush1.msra.mxu0 %v355
          %576 = vmatprep.subr.mxu0 0.0
          %577 = vmatpush1.msra.mxu0 %v354
          %578 = vmatprep.subr.mxu0 0.0
          %579 = vmatpush2.msra.mxu0 0.0
          %580 = vmatprep.subr.mxu0 0.0
          %581 = vmatpush2.msra.mxu0 0.0
          %582 = vmatprep.subr.mxu0 0.0
          %583 = vmatpush2.msra.mxu0 0.0
          %584 = vmatprep.subr.mxu0 0.0
          %585 = vmatpush2.msra.mxu0 0.0
          %586 = vmatprep.subr.mxu0 0.0
          %587 = vmatpush2.msra.mxu0 0.0
          %588 = vmatprep.subr.mxu0 0.0
          %589 = vmatpush2.msra.mxu0 0.0
          %590 = vmatprep.subr.mxu0 0.0
          %591 = vmatpush2.msra.mxu0 0.0
          %592 = vmatprep.subr.mxu0 0.0
          %593 = vmatpush2.msra.mxu0 0.0
          %594 = vmatprep.subr.mxu0 0.0
          %595 = vmatpush2.msra.mxu0 0.0
          %596 = vmatprep.subr.mxu0 0.0
          %597 = vmatpush2.msra.mxu0 0.0
          %598 = vmatprep.subr.mxu0 0.0
          %599 = vmatpush2.msra.mxu0 0.0
          %600 = vmatprep.subr.mxu0 0.0
          %601 = vmatpush2.msra.mxu0 0.0
          %602 = vmatprep.subr.mxu0 0.0
          %603 = vmatpush2.msra.mxu0 0.0
          %604 = vmatprep.subr.mxu0 0.0
          %605 = vmatpush2.msra.mxu0 0.0
          %606 = vmatprep.subr.mxu0 0.0
          %607 = vmatpush2.msra.mxu0 0.0
          %608 = vmatprep.subr.mxu0 0.0
          %609 = vmatpush2.msra.mxu0 0.0
          %610 = vmatprep.mubr.f32.mxu0 0.0
          %611 = vmatmul.mubr.f32.gmra.mxu0 %v541
          %v612 = vpop.f32.mrf.mxu0
          %v613 = vadd.f32 0.0, %v612
          %v614 = vpop.f32.mrf.mxu0
          %615 = vmatprep.mubr.f32.mxu0 0.0
          %616 = vmatmul.mubr.f32.gmra.mxu0 %v544
          %v617 = vpop.f32.mrf.mxu0
          %v618 = vadd.f32 0.0, %v617
          %v619 = vpop.f32.mrf.mxu0
          %620 = vdwg.mxu0
          %v621 = vmul.f32 %v613, 0.041666668
          %v622 = vmul.f32 %v618, 0.041666668
          %v623 = vadd.f32 %v538, %v621
          %v624 = vadd.f32 %v539, %v622
          %v626 = vsel %vm369, %v613, 0
          %v629 = vsel %vm369, %v618, 0
          %631 = vmatprep.subr.mxu0 0.0
          %632 = vmatpush1.msra.mxu0 0.0
          %633 = vmatprep.subr.mxu0 0.0
          %634 = vmatpush1.msra.mxu0 0.0
          %635 = vmatprep.subr.mxu0 0.0
          %636 = vmatpush1.msra.mxu0 0.0
          %637 = vmatprep.subr.mxu0 0.0
          %638 = vmatpush1.msra.mxu0 0.0
          %639 = vmatprep.subr.mxu0 0.0
          %640 = vmatpush1.msra.mxu0 0.0
          %641 = vmatprep.subr.mxu0 0.0
          %642 = vmatpush1.msra.mxu0 0.0
          %643 = vmatprep.subr.mxu0 0.0
          %644 = vmatpush1.msra.mxu0 0.0
          %645 = vmatprep.subr.mxu0 0.0
          %646 = vmatpush1.msra.mxu0 0.0
          %647 = vmatprep.subr.mxu0 0.0
          %648 = vmatpush1.msra.mxu0 0.0
          %649 = vmatprep.subr.mxu0 0.0
          %650 = vmatpush1.msra.mxu0 0.0
          %651 = vmatprep.subr.mxu0 0.0
          %652 = vmatpush1.msra.mxu0 0.0
          %653 = vmatprep.subr.mxu0 0.0
          %654 = vmatpush1.msra.mxu0 0.0
          %655 = vmatprep.subr.mxu0 0.0
          %656 = vmatpush1.msra.mxu0 0.0
          %657 = vmatprep.subr.mxu0 0.0
          %658 = vmatpush1.msra.mxu0 0.0
          %659 = vmatprep.subr.mxu0 0.0
          %660 = vmatpush1.msra.mxu0 %v355
          %661 = vmatprep.subr.mxu0 0.0
          %662 = vmatpush1.msra.mxu0 %v354
          %663 = vmatprep.subr.mxu0 0.0
          %664 = vmatpush2.msra.mxu0 0.0
          %665 = vmatprep.subr.mxu0 0.0
          %666 = vmatpush2.msra.mxu0 0.0
          %667 = vmatprep.subr.mxu0 0.0
          %668 = vmatpush2.msra.mxu0 0.0
          %669 = vmatprep.subr.mxu0 0.0
          %670 = vmatpush2.msra.mxu0 0.0
          %671 = vmatprep.subr.mxu0 0.0
          %672 = vmatpush2.msra.mxu0 0.0
          %673 = vmatprep.subr.mxu0 0.0
          %674 = vmatpush2.msra.mxu0 0.0
          %675 = vmatprep.subr.mxu0 0.0
          %676 = vmatpush2.msra.mxu0 0.0
          %677 = vmatprep.subr.mxu0 0.0
          %678 = vmatpush2.msra.mxu0 0.0
          %679 = vmatprep.subr.mxu0 0.0
          %680 = vmatpush2.msra.mxu0 0.0
          %681 = vmatprep.subr.mxu0 0.0
          %682 = vmatpush2.msra.mxu0 0.0
          %683 = vmatprep.subr.mxu0 0.0
          %684 = vmatpush2.msra.mxu0 0.0
          %685 = vmatprep.subr.mxu0 0.0
          %686 = vmatpush2.msra.mxu0 0.0
          %687 = vmatprep.subr.mxu0 0.0
          %688 = vmatpush2.msra.mxu0 0.0
          %689 = vmatprep.subr.mxu0 0.0
          %690 = vmatpush2.msra.mxu0 0.0
          %691 = vmatprep.subr.mxu0 0.0
          %692 = vmatpush2.msra.mxu0 0.0
          %693 = vmatprep.subr.mxu0 0.0
          %694 = vmatpush2.msra.mxu0 0.0
          %695 = vmatprep.mubr.f32.mxu0 0.0
          %696 = vmatmul.mubr.f32.gmra.mxu0 %v626
          %v697 = vpop.f32.mrf.mxu0
          %v698 = vadd.f32 0.0, %v697
          %v699 = vpop.f32.mrf.mxu0
          %700 = vmatprep.mubr.f32.mxu0 0.0
          %701 = vmatmul.mubr.f32.gmra.mxu0 %v629
          %v702 = vpop.f32.mrf.mxu0
          %v703 = vadd.f32 0.0, %v702
          %v704 = vpop.f32.mrf.mxu0
          %705 = vdwg.mxu0
          %v706 = vmul.f32 %v698, 0.008333334
          %v707 = vmul.f32 %v703, 0.008333334
          %v708 = vadd.f32 %v623, %v706
          %v709 = vadd.f32 %v624, %v707
          %v711 = vsel %vm369, %v698, 0
          %v714 = vsel %vm369, %v703, 0
          %716 = vmatprep.subr.mxu0 0.0
          %717 = vmatpush1.msra.mxu0 0.0
          %718 = vmatprep.subr.mxu0 0.0
          %719 = vmatpush1.msra.mxu0 0.0
          %720 = vmatprep.subr.mxu0 0.0
          %721 = vmatpush1.msra.mxu0 0.0
          %722 = vmatprep.subr.mxu0 0.0
          %723 = vmatpush1.msra.mxu0 0.0
          %724 = vmatprep.subr.mxu0 0.0
          %725 = vmatpush1.msra.mxu0 0.0
          %726 = vmatprep.subr.mxu0 0.0
          %727 = vmatpush1.msra.mxu0 0.0
          %728 = vmatprep.subr.mxu0 0.0
          %729 = vmatpush1.msra.mxu0 0.0
          %730 = vmatprep.subr.mxu0 0.0
          %731 = vmatpush1.msra.mxu0 0.0
          %732 = vmatprep.subr.mxu0 0.0
          %733 = vmatpush1.msra.mxu0 0.0
          %734 = vmatprep.subr.mxu0 0.0
          %735 = vmatpush1.msra.mxu0 0.0
          %736 = vmatprep.subr.mxu0 0.0
          %737 = vmatpush1.msra.mxu0 0.0
          %738 = vmatprep.subr.mxu0 0.0
          %739 = vmatpush1.msra.mxu0 0.0
          %740 = vmatprep.subr.mxu0 0.0
          %741 = vmatpush1.msra.mxu0 0.0
          %742 = vmatprep.subr.mxu0 0.0
          %743 = vmatpush1.msra.mxu0 0.0
          %744 = vmatprep.subr.mxu0 0.0
          %745 = vmatpush1.msra.mxu0 %v355
          %746 = vmatprep.subr.mxu0 0.0
          %747 = vmatpush1.msra.mxu0 %v354
          %748 = vmatprep.subr.mxu0 0.0
          %749 = vmatpush2.msra.mxu0 0.0
          %750 = vmatprep.subr.mxu0 0.0
          %751 = vmatpush2.msra.mxu0 0.0
          %752 = vmatprep.subr.mxu0 0.0
          %753 = vmatpush2.msra.mxu0 0.0
          %754 = vmatprep.subr.mxu0 0.0
          %755 = vmatpush2.msra.mxu0 0.0
          %756 = vmatprep.subr.mxu0 0.0
          %757 = vmatpush2.msra.mxu0 0.0
          %758 = vmatprep.subr.mxu0 0.0
          %759 = vmatpush2.msra.mxu0 0.0
          %760 = vmatprep.subr.mxu0 0.0
          %761 = vmatpush2.msra.mxu0 0.0
          %762 = vmatprep.subr.mxu0 0.0
          %763 = vmatpush2.msra.mxu0 0.0
          %764 = vmatprep.subr.mxu0 0.0
          %765 = vmatpush2.msra.mxu0 0.0
          %766 = vmatprep.subr.mxu0 0.0
          %767 = vmatpush2.msra.mxu0 0.0
          %768 = vmatprep.subr.mxu0 0.0
          %769 = vmatpush2.msra.mxu0 0.0
          %770 = vmatprep.subr.mxu0 0.0
          %771 = vmatpush2.msra.mxu0 0.0
          %772 = vmatprep.subr.mxu0 0.0
          %773 = vmatpush2.msra.mxu0 0.0
          %774 = vmatprep.subr.mxu0 0.0
          %775 = vmatpush2.msra.mxu0 0.0
          %776 = vmatprep.subr.mxu0 0.0
          %777 = vmatpush2.msra.mxu0 0.0
          %778 = vmatprep.subr.mxu0 0.0
          %779 = vmatpush2.msra.mxu0 0.0
          %780 = vmatprep.mubr.f32.mxu0 0.0
          %781 = vmatmul.mubr.f32.gmra.mxu0 %v711
          %v782 = vpop.f32.mrf.mxu0
          %v783 = vadd.f32 0.0, %v782
          %v784 = vpop.f32.mrf.mxu0
          %785 = vmatprep.mubr.f32.mxu0 0.0
          %786 = vmatmul.mubr.f32.gmra.mxu0 %v714
          %v787 = vpop.f32.mrf.mxu0
          %v788 = vadd.f32 0.0, %v787
          %v789 = vpop.f32.mrf.mxu0
          %790 = vdwg.mxu0
          %v791 = vmul.f32 %v783, 0.0013888889
          %v792 = vmul.f32 %v788, 0.0013888889
          %v793 = vadd.f32 %v708, %v791
          %v794 = vadd.f32 %v709, %v792
          %v796 = vsel %vm369, %v783, 0
          %v799 = vsel %vm369, %v788, 0
          %801 = vmatprep.subr.mxu0 0.0
          %802 = vmatpush1.msra.mxu0 0.0
          %803 = vmatprep.subr.mxu0 0.0
          %804 = vmatpush1.msra.mxu0 0.0
          %805 = vmatprep.subr.mxu0 0.0
          %806 = vmatpush1.msra.mxu0 0.0
          %807 = vmatprep.subr.mxu0 0.0
          %808 = vmatpush1.msra.mxu0 0.0
          %809 = vmatprep.subr.mxu0 0.0
          %810 = vmatpush1.msra.mxu0 0.0
          %811 = vmatprep.subr.mxu0 0.0
          %812 = vmatpush1.msra.mxu0 0.0
          %813 = vmatprep.subr.mxu0 0.0
          %814 = vmatpush1.msra.mxu0 0.0
          %815 = vmatprep.subr.mxu0 0.0
          %816 = vmatpush1.msra.mxu0 0.0
          %817 = vmatprep.subr.mxu0 0.0
          %818 = vmatpush1.msra.mxu0 0.0
          %819 = vmatprep.subr.mxu0 0.0
          %820 = vmatpush1.msra.mxu0 0.0
          %821 = vmatprep.subr.mxu0 0.0
          %822 = vmatpush1.msra.mxu0 0.0
          %823 = vmatprep.subr.mxu0 0.0
          %824 = vmatpush1.msra.mxu0 0.0
          %825 = vmatprep.subr.mxu0 0.0
          %826 = vmatpush1.msra.mxu0 0.0
          %827 = vmatprep.subr.mxu0 0.0
          %828 = vmatpush1.msra.mxu0 0.0
          %829 = vmatprep.subr.mxu0 0.0
          %830 = vmatpush1.msra.mxu0 %v355
          %831 = vmatprep.subr.mxu0 0.0
          %832 = vmatpush1.msra.mxu0 %v354
          %833 = vmatprep.subr.mxu0 0.0
          %834 = vmatpush2.msra.mxu0 0.0
          %835 = vmatprep.subr.mxu0 0.0
          %836 = vmatpush2.msra.mxu0 0.0
          %837 = vmatprep.subr.mxu0 0.0
          %838 = vmatpush2.msra.mxu0 0.0
          %839 = vmatprep.subr.mxu0 0.0
          %840 = vmatpush2.msra.mxu0 0.0
          %841 = vmatprep.subr.mxu0 0.0
          %842 = vmatpush2.msra.mxu0 0.0
          %843 = vmatprep.subr.mxu0 0.0
          %844 = vmatpush2.msra.mxu0 0.0
          %845 = vmatprep.subr.mxu0 0.0
          %846 = vmatpush2.msra.mxu0 0.0
          %847 = vmatprep.subr.mxu0 0.0
          %848 = vmatpush2.msra.mxu0 0.0
          %849 = vmatprep.subr.mxu0 0.0
          %850 = vmatpush2.msra.mxu0 0.0
          %851 = vmatprep.subr.mxu0 0.0
          %852 = vmatpush2.msra.mxu0 0.0
          %853 = vmatprep.subr.mxu0 0.0
          %854 = vmatpush2.msra.mxu0 0.0
          %855 = vmatprep.subr.mxu0 0.0
          %856 = vmatpush2.msra.mxu0 0.0
          %857 = vmatprep.subr.mxu0 0.0
          %858 = vmatpush2.msra.mxu0 0.0
          %859 = vmatprep.subr.mxu0 0.0
          %860 = vmatpush2.msra.mxu0 0.0
          %861 = vmatprep.subr.mxu0 0.0
          %862 = vmatpush2.msra.mxu0 0.0
          %863 = vmatprep.subr.mxu0 0.0
          %864 = vmatpush2.msra.mxu0 0.0
          %865 = vmatprep.mubr.f32.mxu0 0.0
          %866 = vmatmul.mubr.f32.gmra.mxu0 %v796
          %v867 = vpop.f32.mrf.mxu0
          %v868 = vadd.f32 0.0, %v867
          %v869 = vpop.f32.mrf.mxu0
          %870 = vmatprep.mubr.f32.mxu0 0.0
          %871 = vmatmul.mubr.f32.gmra.mxu0 %v799
          %v872 = vpop.f32.mrf.mxu0
          %v873 = vadd.f32 0.0, %v872
          %v874 = vpop.f32.mrf.mxu0
          %875 = vdwg.mxu0
          %v876 = vmul.f32 %v868, 0.0001984127
          %v877 = vmul.f32 %v873, 0.0001984127
          %v878 = vadd.f32 %v793, %v876
          %v879 = vadd.f32 %v794, %v877
          %v881 = vsel %vm369, %v868, 0
          %v884 = vsel %vm369, %v873, 0
          %886 = vmatprep.subr.mxu0 0.0
          %887 = vmatpush1.msra.mxu0 0.0
          %888 = vmatprep.subr.mxu0 0.0
          %889 = vmatpush1.msra.mxu0 0.0
          %890 = vmatprep.subr.mxu0 0.0
          %891 = vmatpush1.msra.mxu0 0.0
          %892 = vmatprep.subr.mxu0 0.0
          %893 = vmatpush1.msra.mxu0 0.0
          %894 = vmatprep.subr.mxu0 0.0
          %895 = vmatpush1.msra.mxu0 0.0
          %896 = vmatprep.subr.mxu0 0.0
          %897 = vmatpush1.msra.mxu0 0.0
          %898 = vmatprep.subr.mxu0 0.0
          %899 = vmatpush1.msra.mxu0 0.0
          %900 = vmatprep.subr.mxu0 0.0
          %901 = vmatpush1.msra.mxu0 0.0
          %902 = vmatprep.subr.mxu0 0.0
          %903 = vmatpush1.msra.mxu0 0.0
          %904 = vmatprep.subr.mxu0 0.0
          %905 = vmatpush1.msra.mxu0 0.0
          %906 = vmatprep.subr.mxu0 0.0
          %907 = vmatpush1.msra.mxu0 0.0
          %908 = vmatprep.subr.mxu0 0.0
          %909 = vmatpush1.msra.mxu0 0.0
          %910 = vmatprep.subr.mxu0 0.0
          %911 = vmatpush1.msra.mxu0 0.0
          %912 = vmatprep.subr.mxu0 0.0
          %913 = vmatpush1.msra.mxu0 0.0
          %914 = vmatprep.subr.mxu0 0.0
          %915 = vmatpush1.msra.mxu0 %v355
          %916 = vmatprep.subr.mxu0 0.0
          %917 = vmatpush1.msra.mxu0 %v354
          %918 = vmatprep.subr.mxu0 0.0
          %919 = vmatpush2.msra.mxu0 0.0
          %920 = vmatprep.subr.mxu0 0.0
          %921 = vmatpush2.msra.mxu0 0.0
          %922 = vmatprep.subr.mxu0 0.0
          %923 = vmatpush2.msra.mxu0 0.0
          %924 = vmatprep.subr.mxu0 0.0
          %925 = vmatpush2.msra.mxu0 0.0
          %926 = vmatprep.subr.mxu0 0.0
          %927 = vmatpush2.msra.mxu0 0.0
          %928 = vmatprep.subr.mxu0 0.0
          %929 = vmatpush2.msra.mxu0 0.0
          %930 = vmatprep.subr.mxu0 0.0
          %931 = vmatpush2.msra.mxu0 0.0
          %932 = vmatprep.subr.mxu0 0.0
          %933 = vmatpush2.msra.mxu0 0.0
          %934 = vmatprep.subr.mxu0 0.0
          %935 = vmatpush2.msra.mxu0 0.0
          %936 = vmatprep.subr.mxu0 0.0
          %937 = vmatpush2.msra.mxu0 0.0
          %938 = vmatprep.subr.mxu0 0.0
          %939 = vmatpush2.msra.mxu0 0.0
          %940 = vmatprep.subr.mxu0 0.0
          %941 = vmatpush2.msra.mxu0 0.0
          %942 = vmatprep.subr.mxu0 0.0
          %943 = vmatpush2.msra.mxu0 0.0
          %944 = vmatprep.subr.mxu0 0.0
          %945 = vmatpush2.msra.mxu0 0.0
          %946 = vmatprep.subr.mxu0 0.0
          %947 = vmatpush2.msra.mxu0 0.0
          %948 = vmatprep.subr.mxu0 0.0
          %949 = vmatpush2.msra.mxu0 0.0
          %950 = vmatprep.mubr.f32.mxu0 0.0
          %951 = vmatmul.mubr.f32.gmra.mxu0 %v881
          %v952 = vpop.f32.mrf.mxu0
          %v953 = vadd.f32 0.0, %v952
          %v954 = vpop.f32.mrf.mxu0
          %955 = vmatprep.mubr.f32.mxu0 0.0
          %956 = vmatmul.mubr.f32.gmra.mxu0 %v884
          %v957 = vpop.f32.mrf.mxu0
          %v958 = vadd.f32 0.0, %v957
          %v959 = vpop.f32.mrf.mxu0
          %960 = vdwg.mxu0
          %v961 = vmul.f32 %v953, 2.4801588e-05
          %v962 = vmul.f32 %v958, 2.4801588e-05
          %v963 = vadd.f32 %v878, %v961
          %v964 = vadd.f32 %v879, %v962
          %v966 = vsel %vm369, %v953, 0
          %v969 = vsel %vm369, %v958, 0
          %971 = vmatprep.subr.mxu0 0.0
          %972 = vmatpush1.msra.mxu0 0.0
          %973 = vmatprep.subr.mxu0 0.0
          %974 = vmatpush1.msra.mxu0 0.0
          %975 = vmatprep.subr.mxu0 0.0
          %976 = vmatpush1.msra.mxu0 0.0
          %977 = vmatprep.subr.mxu0 0.0
          %978 = vmatpush1.msra.mxu0 0.0
          %979 = vmatprep.subr.mxu0 0.0
          %980 = vmatpush1.msra.mxu0 0.0
          %981 = vmatprep.subr.mxu0 0.0
          %982 = vmatpush1.msra.mxu0 0.0
          %983 = vmatprep.subr.mxu0 0.0
          %984 = vmatpush1.msra.mxu0 0.0
          %985 = vmatprep.subr.mxu0 0.0
          %986 = vmatpush1.msra.mxu0 0.0
          %987 = vmatprep.subr.mxu0 0.0
          %988 = vmatpush1.msra.mxu0 0.0
          %989 = vmatprep.subr.mxu0 0.0
          %990 = vmatpush1.msra.mxu0 0.0
          %991 = vmatprep.subr.mxu0 0.0
          %992 = vmatpush1.msra.mxu0 0.0
          %993 = vmatprep.subr.mxu0 0.0
          %994 = vmatpush1.msra.mxu0 0.0
          %995 = vmatprep.subr.mxu0 0.0
          %996 = vmatpush1.msra.mxu0 0.0
          %997 = vmatprep.subr.mxu0 0.0
          %998 = vmatpush1.msra.mxu0 0.0
          %999 = vmatprep.subr.mxu0 0.0
          %1000 = vmatpush1.msra.mxu0 %v355
          %1001 = vmatprep.subr.mxu0 0.0
          %1002 = vmatpush1.msra.mxu0 %v354
          %1003 = vmatprep.subr.mxu0 0.0
          %1004 = vmatpush2.msra.mxu0 0.0
          %1005 = vmatprep.subr.mxu0 0.0
          %1006 = vmatpush2.msra.mxu0 0.0
          %1007 = vmatprep.subr.mxu0 0.0
          %1008 = vmatpush2.msra.mxu0 0.0
          %1009 = vmatprep.subr.mxu0 0.0
          %1010 = vmatpush2.msra.mxu0 0.0
          %1011 = vmatprep.subr.mxu0 0.0
          %1012 = vmatpush2.msra.mxu0 0.0
          %1013 = vmatprep.subr.mxu0 0.0
          %1014 = vmatpush2.msra.mxu0 0.0
          %1015 = vmatprep.subr.mxu0 0.0
          %1016 = vmatpush2.msra.mxu0 0.0
          %1017 = vmatprep.subr.mxu0 0.0
          %1018 = vmatpush2.msra.mxu0 0.0
          %1019 = vmatprep.subr.mxu0 0.0
          %1020 = vmatpush2.msra.mxu0 0.0
          %1021 = vmatprep.subr.mxu0 0.0
          %1022 = vmatpush2.msra.mxu0 0.0
          %1023 = vmatprep.subr.mxu0 0.0
          %1024 = vmatpush2.msra.mxu0 0.0
          %1025 = vmatprep.subr.mxu0 0.0
          %1026 = vmatpush2.msra.mxu0 0.0
          %1027 = vmatprep.subr.mxu0 0.0
          %1028 = vmatpush2.msra.mxu0 0.0
          %1029 = vmatprep.subr.mxu0 0.0
          %1030 = vmatpush2.msra.mxu0 0.0
          %1031 = vmatprep.subr.mxu0 0.0
          %1032 = vmatpush2.msra.mxu0 0.0
          %1033 = vmatprep.subr.mxu0 0.0
          %1034 = vmatpush2.msra.mxu0 0.0
          %1035 = vmatprep.mubr.f32.mxu0 0.0
          %1036 = vmatmul.mubr.f32.gmra.mxu0 %v966
          %v1037 = vpop.f32.mrf.mxu0
          %v1038 = vadd.f32 0.0, %v1037
          %v1039 = vpop.f32.mrf.mxu0
          %1040 = vmatprep.mubr.f32.mxu0 0.0
          %1041 = vmatmul.mubr.f32.gmra.mxu0 %v969
          %v1042 = vpop.f32.mrf.mxu0
          %v1043 = vadd.f32 0.0, %v1042
          %v1044 = vpop.f32.mrf.mxu0
          %1045 = vdwg.mxu0
          %v1046 = vmul.f32 %v1038, 2.7557319e-06
          %v1047 = vmul.f32 %v1043, 2.7557319e-06
          %v1048 = vadd.f32 %v963, %v1046
          %v1049 = vadd.f32 %v964, %v1047
          %v1051 = vsel %vm369, %v1038, 0
          %v1054 = vsel %vm369, %v1043, 0
          %1056 = vmatprep.subr.mxu0 0.0
          %1057 = vmatpush1.msra.mxu0 0.0
          %1058 = vmatprep.subr.mxu0 0.0
          %1059 = vmatpush1.msra.mxu0 0.0
          %1060 = vmatprep.subr.mxu0 0.0
          %1061 = vmatpush1.msra.mxu0 0.0
          %1062 = vmatprep.subr.mxu0 0.0
          %1063 = vmatpush1.msra.mxu0 0.0
          %1064 = vmatprep.subr.mxu0 0.0
          %1065 = vmatpush1.msra.mxu0 0.0
          %1066 = vmatprep.subr.mxu0 0.0
          %1067 = vmatpush1.msra.mxu0 0.0
          %1068 = vmatprep.subr.mxu0 0.0
          %1069 = vmatpush1.msra.mxu0 0.0
          %1070 = vmatprep.subr.mxu0 0.0
          %1071 = vmatpush1.msra.mxu0 0.0
          %1072 = vmatprep.subr.mxu0 0.0
          %1073 = vmatpush1.msra.mxu0 0.0
          %1074 = vmatprep.subr.mxu0 0.0
          %1075 = vmatpush1.msra.mxu0 0.0
          %1076 = vmatprep.subr.mxu0 0.0
          %1077 = vmatpush1.msra.mxu0 0.0
          %1078 = vmatprep.subr.mxu0 0.0
          %1079 = vmatpush1.msra.mxu0 0.0
          %1080 = vmatprep.subr.mxu0 0.0
          %1081 = vmatpush1.msra.mxu0 0.0
          %1082 = vmatprep.subr.mxu0 0.0
          %1083 = vmatpush1.msra.mxu0 0.0
          %1084 = vmatprep.subr.mxu0 0.0
          %1085 = vmatpush1.msra.mxu0 %v355
          %1086 = vmatprep.subr.mxu0 0.0
          %1087 = vmatpush1.msra.mxu0 %v354
          %1088 = vmatprep.subr.mxu0 0.0
          %1089 = vmatpush2.msra.mxu0 0.0
          %1090 = vmatprep.subr.mxu0 0.0
          %1091 = vmatpush2.msra.mxu0 0.0
          %1092 = vmatprep.subr.mxu0 0.0
          %1093 = vmatpush2.msra.mxu0 0.0
          %1094 = vmatprep.subr.mxu0 0.0
          %1095 = vmatpush2.msra.mxu0 0.0
          %1096 = vmatprep.subr.mxu0 0.0
          %1097 = vmatpush2.msra.mxu0 0.0
          %1098 = vmatprep.subr.mxu0 0.0
          %1099 = vmatpush2.msra.mxu0 0.0
          %1100 = vmatprep.subr.mxu0 0.0
          %1101 = vmatpush2.msra.mxu0 0.0
          %1102 = vmatprep.subr.mxu0 0.0
          %1103 = vmatpush2.msra.mxu0 0.0
          %1104 = vmatprep.subr.mxu0 0.0
          %1105 = vmatpush2.msra.mxu0 0.0
          %1106 = vmatprep.subr.mxu0 0.0
          %1107 = vmatpush2.msra.mxu0 0.0
          %1108 = vmatprep.subr.mxu0 0.0
          %1109 = vmatpush2.msra.mxu0 0.0
          %1110 = vmatprep.subr.mxu0 0.0
          %1111 = vmatpush2.msra.mxu0 0.0
          %1112 = vmatprep.subr.mxu0 0.0
          %1113 = vmatpush2.msra.mxu0 0.0
          %1114 = vmatprep.subr.mxu0 0.0
          %1115 = vmatpush2.msra.mxu0 0.0
          %1116 = vmatprep.subr.mxu0 0.0
          %1117 = vmatpush2.msra.mxu0 0.0
          %1118 = vmatprep.subr.mxu0 0.0
          %1119 = vmatpush2.msra.mxu0 0.0
          %1120 = vmatprep.mubr.f32.mxu0 0.0
          %1121 = vmatmul.mubr.f32.gmra.mxu0 %v1051
          %v1122 = vpop.f32.mrf.mxu0
          %v1123 = vadd.f32 0.0, %v1122
          %v1124 = vpop.f32.mrf.mxu0
          %1125 = vmatprep.mubr.f32.mxu0 0.0
          %1126 = vmatmul.mubr.f32.gmra.mxu0 %v1054
          %v1127 = vpop.f32.mrf.mxu0
          %v1128 = vadd.f32 0.0, %v1127
          %v1129 = vpop.f32.mrf.mxu0
          %1130 = vdwg.mxu0
          %v1131 = vmul.f32 %v1123, 2.755732e-07
          %v1132 = vmul.f32 %v1128, 2.755732e-07
          %v1133 = vadd.f32 %v1048, %v1131
          %v1134 = vadd.f32 %v1049, %v1132
          %v1136 = vsel %vm369, %v1133, 0
          %v1139 = vsel %vm369, %v1134, 0
          %1141 = vmatprep.subr.mxu0 0.0
          %1142 = vmatpush1.msra.mxu0 0.0
          %1143 = vmatprep.subr.mxu0 0.0
          %1144 = vmatpush1.msra.mxu0 0.0
          %1145 = vmatprep.subr.mxu0 0.0
          %1146 = vmatpush1.msra.mxu0 0.0
          %1147 = vmatprep.subr.mxu0 0.0
          %1148 = vmatpush1.msra.mxu0 0.0
          %1149 = vmatprep.subr.mxu0 0.0
          %1150 = vmatpush1.msra.mxu0 0.0
          %1151 = vmatprep.subr.mxu0 0.0
          %1152 = vmatpush1.msra.mxu0 0.0
          %1153 = vmatprep.subr.mxu0 0.0
          %1154 = vmatpush1.msra.mxu0 0.0
          %1155 = vmatprep.subr.mxu0 0.0
          %1156 = vmatpush1.msra.mxu0 0.0
          %1157 = vmatprep.subr.mxu0 0.0
          %1158 = vmatpush1.msra.mxu0 0.0
          %1159 = vmatprep.subr.mxu0 0.0
          %1160 = vmatpush1.msra.mxu0 0.0
          %1161 = vmatprep.subr.mxu0 0.0
          %1162 = vmatpush1.msra.mxu0 0.0
          %1163 = vmatprep.subr.mxu0 0.0
          %1164 = vmatpush1.msra.mxu0 0.0
          %1165 = vmatprep.subr.mxu0 0.0
          %1166 = vmatpush1.msra.mxu0 0.0
          %1167 = vmatprep.subr.mxu0 0.0
          %1168 = vmatpush1.msra.mxu0 0.0
          %1169 = vmatprep.subr.mxu0 0.0
          %1170 = vmatpush1.msra.mxu0 %v1134
          %1171 = vmatprep.subr.mxu0 0.0
          %1172 = vmatpush1.msra.mxu0 %v1133
          %1173 = vmatprep.subr.mxu0 0.0
          %1174 = vmatpush2.msra.mxu0 0.0
          %1175 = vmatprep.subr.mxu0 0.0
          %1176 = vmatpush2.msra.mxu0 0.0
          %1177 = vmatprep.subr.mxu0 0.0
          %1178 = vmatpush2.msra.mxu0 0.0
          %1179 = vmatprep.subr.mxu0 0.0
          %1180 = vmatpush2.msra.mxu0 0.0
          %1181 = vmatprep.subr.mxu0 0.0
          %1182 = vmatpush2.msra.mxu0 0.0
          %1183 = vmatprep.subr.mxu0 0.0
          %1184 = vmatpush2.msra.mxu0 0.0
          %1185 = vmatprep.subr.mxu0 0.0
          %1186 = vmatpush2.msra.mxu0 0.0
          %1187 = vmatprep.subr.mxu0 0.0
          %1188 = vmatpush2.msra.mxu0 0.0
          %1189 = vmatprep.subr.mxu0 0.0
          %1190 = vmatpush2.msra.mxu0 0.0
          %1191 = vmatprep.subr.mxu0 0.0
          %1192 = vmatpush2.msra.mxu0 0.0
          %1193 = vmatprep.subr.mxu0 0.0
          %1194 = vmatpush2.msra.mxu0 0.0
          %1195 = vmatprep.subr.mxu0 0.0
          %1196 = vmatpush2.msra.mxu0 0.0
          %1197 = vmatprep.subr.mxu0 0.0
          %1198 = vmatpush2.msra.mxu0 0.0
          %1199 = vmatprep.subr.mxu0 0.0
          %1200 = vmatpush2.msra.mxu0 0.0
          %1201 = vmatprep.subr.mxu0 0.0
          %1202 = vmatpush2.msra.mxu0 0.0
          %1203 = vmatprep.subr.mxu0 0.0
          %1204 = vmatpush2.msra.mxu0 0.0
          %1205 = vmatprep.mubr.f32.mxu0 0.0
          %1206 = vmatmul.mubr.f32.gmra.mxu0 %v1136
          %v1207 = vpop.f32.mrf.mxu0
          %v1208 = vadd.f32 0.0, %v1207
          %v1209 = vpop.f32.mrf.mxu0
          %1210 = vmatprep.mubr.f32.mxu0 0.0
          %1211 = vmatmul.mubr.f32.gmra.mxu0 %v1139
          %v1212 = vpop.f32.mrf.mxu0
          %v1213 = vadd.f32 0.0, %v1212
          %v1214 = vpop.f32.mrf.mxu0
          %1215 = vdwg.mxu0
          %v1217 = vsel %vm369, %v1208, 0
          %v1220 = vsel %vm369, %v1213, 0
          %1222 = vmatprep.subr.mxu0 0.0
          %1223 = vmatpush1.msra.mxu0 0.0
          %1224 = vmatprep.subr.mxu0 0.0
          %1225 = vmatpush1.msra.mxu0 0.0
          %1226 = vmatprep.subr.mxu0 0.0
          %1227 = vmatpush1.msra.mxu0 0.0
          %1228 = vmatprep.subr.mxu0 0.0
          %1229 = vmatpush1.msra.mxu0 0.0
          %1230 = vmatprep.subr.mxu0 0.0
          %1231 = vmatpush1.msra.mxu0 0.0
          %1232 = vmatprep.subr.mxu0 0.0
          %1233 = vmatpush1.msra.mxu0 0.0
          %1234 = vmatprep.subr.mxu0 0.0
          %1235 = vmatpush1.msra.mxu0 0.0
          %1236 = vmatprep.subr.mxu0 0.0
          %1237 = vmatpush1.msra.mxu0 0.0
          %1238 = vmatprep.subr.mxu0 0.0
          %1239 = vmatpush1.msra.mxu0 0.0
          %1240 = vmatprep.subr.mxu0 0.0
          %1241 = vmatpush1.msra.mxu0 0.0
          %1242 = vmatprep.subr.mxu0 0.0
          %1243 = vmatpush1.msra.mxu0 0.0
          %1244 = vmatprep.subr.mxu0 0.0
          %1245 = vmatpush1.msra.mxu0 0.0
          %1246 = vmatprep.subr.mxu0 0.0
          %1247 = vmatpush1.msra.mxu0 0.0
          %1248 = vmatprep.subr.mxu0 0.0
          %1249 = vmatpush1.msra.mxu0 0.0
          %1250 = vmatprep.subr.mxu0 0.0
          %1251 = vmatpush1.msra.mxu0 %v1213
          %1252 = vmatprep.subr.mxu0 0.0
          %1253 = vmatpush1.msra.mxu0 %v1208
          %1254 = vmatprep.subr.mxu0 0.0
          %1255 = vmatpush2.msra.mxu0 0.0
          %1256 = vmatprep.subr.mxu0 0.0
          %1257 = vmatpush2.msra.mxu0 0.0
          %1258 = vmatprep.subr.mxu0 0.0
          %1259 = vmatpush2.msra.mxu0 0.0
          %1260 = vmatprep.subr.mxu0 0.0
          %1261 = vmatpush2.msra.mxu0 0.0
          %1262 = vmatprep.subr.mxu0 0.0
          %1263 = vmatpush2.msra.mxu0 0.0
          %1264 = vmatprep.subr.mxu0 0.0
          %1265 = vmatpush2.msra.mxu0 0.0
          %1266 = vmatprep.subr.mxu0 0.0
          %1267 = vmatpush2.msra.mxu0 0.0
          %1268 = vmatprep.subr.mxu0 0.0
          %1269 = vmatpush2.msra.mxu0 0.0
          %1270 = vmatprep.subr.mxu0 0.0
          %1271 = vmatpush2.msra.mxu0 0.0
          %1272 = vmatprep.subr.mxu0 0.0
          %1273 = vmatpush2.msra.mxu0 0.0
          %1274 = vmatprep.subr.mxu0 0.0
          %1275 = vmatpush2.msra.mxu0 0.0
          %1276 = vmatprep.subr.mxu0 0.0
          %1277 = vmatpush2.msra.mxu0 0.0
          %1278 = vmatprep.subr.mxu0 0.0
          %1279 = vmatpush2.msra.mxu0 0.0
          %1280 = vmatprep.subr.mxu0 0.0
          %1281 = vmatpush2.msra.mxu0 0.0
          %1282 = vmatprep.subr.mxu0 0.0
          %1283 = vmatpush2.msra.mxu0 0.0
          %1284 = vmatprep.subr.mxu0 0.0
          %1285 = vmatpush2.msra.mxu0 0.0
          %1286 = vmatprep.mubr.f32.mxu0 0.0
          %1287 = vmatmul.mubr.f32.gmra.mxu0 %v1217
          %v1288 = vpop.f32.mrf.mxu0
          %v1289 = vadd.f32 0.0, %v1288
          %v1290 = vpop.f32.mrf.mxu0
          %1291 = vmatprep.mubr.f32.mxu0 0.0
          %1292 = vmatmul.mubr.f32.gmra.mxu0 %v1220
          %v1293 = vpop.f32.mrf.mxu0
          %v1294 = vadd.f32 0.0, %v1293
          %v1295 = vpop.f32.mrf.mxu0
          %1296 = vdwg.mxu0
          %v1298 = vsel %vm369, %v1289, 0
          %v1301 = vsel %vm369, %v1294, 0
          %1303 = vmatprep.subr.mxu0 0.0
          %1304 = vmatpush1.msra.mxu0 0.0
          %1305 = vmatprep.subr.mxu0 0.0
          %1306 = vmatpush1.msra.mxu0 0.0
          %1307 = vmatprep.subr.mxu0 0.0
          %1308 = vmatpush1.msra.mxu0 0.0
          %1309 = vmatprep.subr.mxu0 0.0
          %1310 = vmatpush1.msra.mxu0 0.0
          %1311 = vmatprep.subr.mxu0 0.0
          %1312 = vmatpush1.msra.mxu0 0.0
          %1313 = vmatprep.subr.mxu0 0.0
          %1314 = vmatpush1.msra.mxu0 0.0
          %1315 = vmatprep.subr.mxu0 0.0
          %1316 = vmatpush1.msra.mxu0 0.0
          %1317 = vmatprep.subr.mxu0 0.0
          %1318 = vmatpush1.msra.mxu0 0.0
          %1319 = vmatprep.subr.mxu0 0.0
          %1320 = vmatpush1.msra.mxu0 0.0
          %1321 = vmatprep.subr.mxu0 0.0
          %1322 = vmatpush1.msra.mxu0 0.0
          %1323 = vmatprep.subr.mxu0 0.0
          %1324 = vmatpush1.msra.mxu0 0.0
          %1325 = vmatprep.subr.mxu0 0.0
          %1326 = vmatpush1.msra.mxu0 0.0
          %1327 = vmatprep.subr.mxu0 0.0
          %1328 = vmatpush1.msra.mxu0 0.0
          %1329 = vmatprep.subr.mxu0 0.0
          %1330 = vmatpush1.msra.mxu0 0.0
          %1331 = vmatprep.subr.mxu0 0.0
          %1332 = vmatpush1.msra.mxu0 %v1294
          %1333 = vmatprep.subr.mxu0 0.0
          %1334 = vmatpush1.msra.mxu0 %v1289
          %1335 = vmatprep.subr.mxu0 0.0
          %1336 = vmatpush2.msra.mxu0 0.0
          %1337 = vmatprep.subr.mxu0 0.0
          %1338 = vmatpush2.msra.mxu0 0.0
          %1339 = vmatprep.subr.mxu0 0.0
          %1340 = vmatpush2.msra.mxu0 0.0
          %1341 = vmatprep.subr.mxu0 0.0
          %1342 = vmatpush2.msra.mxu0 0.0
          %1343 = vmatprep.subr.mxu0 0.0
          %1344 = vmatpush2.msra.mxu0 0.0
          %1345 = vmatprep.subr.mxu0 0.0
          %1346 = vmatpush2.msra.mxu0 0.0
          %1347 = vmatprep.subr.mxu0 0.0
          %1348 = vmatpush2.msra.mxu0 0.0
          %1349 = vmatprep.subr.mxu0 0.0
          %1350 = vmatpush2.msra.mxu0 0.0
          %1351 = vmatprep.subr.mxu0 0.0
          %1352 = vmatpush2.msra.mxu0 0.0
          %1353 = vmatprep.subr.mxu0 0.0
          %1354 = vmatpush2.msra.mxu0 0.0
          %1355 = vmatprep.subr.mxu0 0.0
          %1356 = vmatpush2.msra.mxu0 0.0
          %1357 = vmatprep.subr.mxu0 0.0
          %1358 = vmatpush2.msra.mxu0 0.0
          %1359 = vmatprep.subr.mxu0 0.0
          %1360 = vmatpush2.msra.mxu0 0.0
          %1361 = vmatprep.subr.mxu0 0.0
          %1362 = vmatpush2.msra.mxu0 0.0
          %1363 = vmatprep.subr.mxu0 0.0
          %1364 = vmatpush2.msra.mxu0 0.0
          %1365 = vmatprep.subr.mxu0 0.0
          %1366 = vmatpush2.msra.mxu0 0.0
          %1367 = vmatprep.mubr.f32.mxu0 0.0
          %1368 = vmatmul.mubr.f32.gmra.mxu0 %v1298
          %v1369 = vpop.f32.mrf.mxu0
          %v1370 = vadd.f32 0.0, %v1369
          %v1371 = vpop.f32.mrf.mxu0
          %1372 = vmatprep.mubr.f32.mxu0 0.0
          %1373 = vmatmul.mubr.f32.gmra.mxu0 %v1301
          %v1374 = vpop.f32.mrf.mxu0
          %v1375 = vadd.f32 0.0, %v1374
          %v1376 = vpop.f32.mrf.mxu0
          %1377 = vdwg.mxu0
          %v1379 = vsel %vm369, %v1370, 0
          %v1382 = vsel %vm369, %v1375, 0
          %1384 = vmatprep.subr.mxu0 0.0
          %1385 = vmatpush1.msra.mxu0 0.0
          %1386 = vmatprep.subr.mxu0 0.0
          %1387 = vmatpush1.msra.mxu0 0.0
          %1388 = vmatprep.subr.mxu0 0.0
          %1389 = vmatpush1.msra.mxu0 0.0
          %1390 = vmatprep.subr.mxu0 0.0
          %1391 = vmatpush1.msra.mxu0 0.0
          %1392 = vmatprep.subr.mxu0 0.0
          %1393 = vmatpush1.msra.mxu0 0.0
          %1394 = vmatprep.subr.mxu0 0.0
          %1395 = vmatpush1.msra.mxu0 0.0
          %1396 = vmatprep.subr.mxu0 0.0
          %1397 = vmatpush1.msra.mxu0 0.0
          %1398 = vmatprep.subr.mxu0 0.0
          %1399 = vmatpush1.msra.mxu0 0.0
          %1400 = vmatprep.subr.mxu0 0.0
          %1401 = vmatpush1.msra.mxu0 0.0
          %1402 = vmatprep.subr.mxu0 0.0
          %1403 = vmatpush1.msra.mxu0 0.0
          %1404 = vmatprep.subr.mxu0 0.0
          %1405 = vmatpush1.msra.mxu0 0.0
          %1406 = vmatprep.subr.mxu0 0.0
          %1407 = vmatpush1.msra.mxu0 0.0
          %1408 = vmatprep.subr.mxu0 0.0
          %1409 = vmatpush1.msra.mxu0 0.0
          %1410 = vmatprep.subr.mxu0 0.0
          %1411 = vmatpush1.msra.mxu0 0.0
          %1412 = vmatprep.subr.mxu0 0.0
          %1413 = vmatpush1.msra.mxu0 %v1375
          %1414 = vmatprep.subr.mxu0 0.0
          %1415 = vmatpush1.msra.mxu0 %v1370
          %1416 = vmatprep.subr.mxu0 0.0
          %1417 = vmatpush2.msra.mxu0 0.0
          %1418 = vmatprep.subr.mxu0 0.0
          %1419 = vmatpush2.msra.mxu0 0.0
          %1420 = vmatprep.subr.mxu0 0.0
          %1421 = vmatpush2.msra.mxu0 0.0
          %1422 = vmatprep.subr.mxu0 0.0
          %1423 = vmatpush2.msra.mxu0 0.0
          %1424 = vmatprep.subr.mxu0 0.0
          %1425 = vmatpush2.msra.mxu0 0.0
          %1426 = vmatprep.subr.mxu0 0.0
          %1427 = vmatpush2.msra.mxu0 0.0
          %1428 = vmatprep.subr.mxu0 0.0
          %1429 = vmatpush2.msra.mxu0 0.0
          %1430 = vmatprep.subr.mxu0 0.0
          %1431 = vmatpush2.msra.mxu0 0.0
          %1432 = vmatprep.subr.mxu0 0.0
          %1433 = vmatpush2.msra.mxu0 0.0
          %1434 = vmatprep.subr.mxu0 0.0
          %1435 = vmatpush2.msra.mxu0 0.0
          %1436 = vmatprep.subr.mxu0 0.0
          %1437 = vmatpush2.msra.mxu0 0.0
          %1438 = vmatprep.subr.mxu0 0.0
          %1439 = vmatpush2.msra.mxu0 0.0
          %1440 = vmatprep.subr.mxu0 0.0
          %1441 = vmatpush2.msra.mxu0 0.0
          %1442 = vmatprep.subr.mxu0 0.0
          %1443 = vmatpush2.msra.mxu0 0.0
          %1444 = vmatprep.subr.mxu0 0.0
          %1445 = vmatpush2.msra.mxu0 0.0
          %1446 = vmatprep.subr.mxu0 0.0
          %1447 = vmatpush2.msra.mxu0 0.0
          %1448 = vmatprep.mubr.f32.mxu0 0.0
          %1449 = vmatmul.mubr.f32.gmra.mxu0 %v1379
          %v1450 = vpop.f32.mrf.mxu0
          %v1451 = vadd.f32 0.0, %v1450
          %v1452 = vpop.f32.mrf.mxu0
          %1453 = vmatprep.mubr.f32.mxu0 0.0
          %1454 = vmatmul.mubr.f32.gmra.mxu0 %v1382
          %v1455 = vpop.f32.mrf.mxu0
          %v1456 = vadd.f32 0.0, %v1455
          %v1457 = vpop.f32.mrf.mxu0
          %1458 = vdwg.mxu0
          %v1460 = vsel %vm369, %v1451, 0
          %v1463 = vsel %vm369, %v1456, 0
          %1465 = vmatprep.subr.mxu0 0.0
          %1466 = vmatpush1.msra.mxu0 0.0
          %1467 = vmatprep.subr.mxu0 0.0
          %1468 = vmatpush1.msra.mxu0 0.0
          %1469 = vmatprep.subr.mxu0 0.0
          %1470 = vmatpush1.msra.mxu0 0.0
          %1471 = vmatprep.subr.mxu0 0.0
          %1472 = vmatpush1.msra.mxu0 0.0
          %1473 = vmatprep.subr.mxu0 0.0
          %1474 = vmatpush1.msra.mxu0 0.0
          %1475 = vmatprep.subr.mxu0 0.0
          %1476 = vmatpush1.msra.mxu0 0.0
          %1477 = vmatprep.subr.mxu0 0.0
          %1478 = vmatpush1.msra.mxu0 0.0
          %1479 = vmatprep.subr.mxu0 0.0
          %1480 = vmatpush1.msra.mxu0 0.0
          %1481 = vmatprep.subr.mxu0 0.0
          %1482 = vmatpush1.msra.mxu0 0.0
          %1483 = vmatprep.subr.mxu0 0.0
          %1484 = vmatpush1.msra.mxu0 0.0
          %1485 = vmatprep.subr.mxu0 0.0
          %1486 = vmatpush1.msra.mxu0 0.0
          %1487 = vmatprep.subr.mxu0 0.0
          %1488 = vmatpush1.msra.mxu0 0.0
          %1489 = vmatprep.subr.mxu0 0.0
          %1490 = vmatpush1.msra.mxu0 0.0
          %1491 = vmatprep.subr.mxu0 0.0
          %1492 = vmatpush1.msra.mxu0 0.0
          %1493 = vmatprep.subr.mxu0 0.0
          %1494 = vmatpush1.msra.mxu0 %v1456
          %1495 = vmatprep.subr.mxu0 0.0
          %1496 = vmatpush1.msra.mxu0 %v1451
          %1497 = vmatprep.subr.mxu0 0.0
          %1498 = vmatpush2.msra.mxu0 0.0
          %1499 = vmatprep.subr.mxu0 0.0
          %1500 = vmatpush2.msra.mxu0 0.0
          %1501 = vmatprep.subr.mxu0 0.0
          %1502 = vmatpush2.msra.mxu0 0.0
          %1503 = vmatprep.subr.mxu0 0.0
          %1504 = vmatpush2.msra.mxu0 0.0
          %1505 = vmatprep.subr.mxu0 0.0
          %1506 = vmatpush2.msra.mxu0 0.0
          %1507 = vmatprep.subr.mxu0 0.0
          %1508 = vmatpush2.msra.mxu0 0.0
          %1509 = vmatprep.subr.mxu0 0.0
          %1510 = vmatpush2.msra.mxu0 0.0
          %1511 = vmatprep.subr.mxu0 0.0
          %1512 = vmatpush2.msra.mxu0 0.0
          %1513 = vmatprep.subr.mxu0 0.0
          %1514 = vmatpush2.msra.mxu0 0.0
          %1515 = vmatprep.subr.mxu0 0.0
          %1516 = vmatpush2.msra.mxu0 0.0
          %1517 = vmatprep.subr.mxu0 0.0
          %1518 = vmatpush2.msra.mxu0 0.0
          %1519 = vmatprep.subr.mxu0 0.0
          %1520 = vmatpush2.msra.mxu0 0.0
          %1521 = vmatprep.subr.mxu0 0.0
          %1522 = vmatpush2.msra.mxu0 0.0
          %1523 = vmatprep.subr.mxu0 0.0
          %1524 = vmatpush2.msra.mxu0 0.0
          %1525 = vmatprep.subr.mxu0 0.0
          %1526 = vmatpush2.msra.mxu0 0.0
          %1527 = vmatprep.subr.mxu0 0.0
          %1528 = vmatpush2.msra.mxu0 0.0
          %1529 = vmatprep.mubr.f32.mxu0 0.0
          %1530 = vmatmul.mubr.f32.gmra.mxu0 %v1460
          %v1531 = vpop.f32.mrf.mxu0
          %v1532 = vadd.f32 0.0, %v1531
          %v1533 = vpop.f32.mrf.mxu0
          %1534 = vmatprep.mubr.f32.mxu0 0.0
          %1535 = vmatmul.mubr.f32.gmra.mxu0 %v1463
          %v1536 = vpop.f32.mrf.mxu0
          %v1537 = vadd.f32 0.0, %v1536
          %v1538 = vpop.f32.mrf.mxu0
          %1539 = vdwg.mxu0
          %v1541 = vsel %vm369, %v1532, 0
          %v1544 = vsel %vm369, %v1537, 0
          %1546 = vmatprep.subr.mxu0 0.0
          %1547 = vmatpush1.msra.mxu0 0.0
          %1548 = vmatprep.subr.mxu0 0.0
          %1549 = vmatpush1.msra.mxu0 0.0
          %1550 = vmatprep.subr.mxu0 0.0
          %1551 = vmatpush1.msra.mxu0 0.0
          %1552 = vmatprep.subr.mxu0 0.0
          %1553 = vmatpush1.msra.mxu0 0.0
          %1554 = vmatprep.subr.mxu0 0.0
          %1555 = vmatpush1.msra.mxu0 0.0
          %1556 = vmatprep.subr.mxu0 0.0
          %1557 = vmatpush1.msra.mxu0 0.0
          %1558 = vmatprep.subr.mxu0 0.0
          %1559 = vmatpush1.msra.mxu0 0.0
          %1560 = vmatprep.subr.mxu0 0.0
          %1561 = vmatpush1.msra.mxu0 0.0
          %1562 = vmatprep.subr.mxu0 0.0
          %1563 = vmatpush1.msra.mxu0 0.0
          %1564 = vmatprep.subr.mxu0 0.0
          %1565 = vmatpush1.msra.mxu0 0.0
          %1566 = vmatprep.subr.mxu0 0.0
          %1567 = vmatpush1.msra.mxu0 0.0
          %1568 = vmatprep.subr.mxu0 0.0
          %1569 = vmatpush1.msra.mxu0 0.0
          %1570 = vmatprep.subr.mxu0 0.0
          %1571 = vmatpush1.msra.mxu0 0.0
          %1572 = vmatprep.subr.mxu0 0.0
          %1573 = vmatpush1.msra.mxu0 0.0
          %1574 = vmatprep.subr.mxu0 0.0
          %1575 = vmatpush1.msra.mxu0 %v1537
          %1576 = vmatprep.subr.mxu0 0.0
          %1577 = vmatpush1.msra.mxu0 %v1532
          %1578 = vmatprep.subr.mxu0 0.0
          %1579 = vmatpush2.msra.mxu0 0.0
          %1580 = vmatprep.subr.mxu0 0.0
          %1581 = vmatpush2.msra.mxu0 0.0
          %1582 = vmatprep.subr.mxu0 0.0
          %1583 = vmatpush2.msra.mxu0 0.0
          %1584 = vmatprep.subr.mxu0 0.0
          %1585 = vmatpush2.msra.mxu0 0.0
          %1586 = vmatprep.subr.mxu0 0.0
          %1587 = vmatpush2.msra.mxu0 0.0
          %1588 = vmatprep.subr.mxu0 0.0
          %1589 = vmatpush2.msra.mxu0 0.0
          %1590 = vmatprep.subr.mxu0 0.0
          %1591 = vmatpush2.msra.mxu0 0.0
          %1592 = vmatprep.subr.mxu0 0.0
          %1593 = vmatpush2.msra.mxu0 0.0
          %1594 = vmatprep.subr.mxu0 0.0
          %1595 = vmatpush2.msra.mxu0 0.0
          %1596 = vmatprep.subr.mxu0 0.0
          %1597 = vmatpush2.msra.mxu0 0.0
          %1598 = vmatprep.subr.mxu0 0.0
          %1599 = vmatpush2.msra.mxu0 0.0
          %1600 = vmatprep.subr.mxu0 0.0
          %1601 = vmatpush2.msra.mxu0 0.0
          %1602 = vmatprep.subr.mxu0 0.0
          %1603 = vmatpush2.msra.mxu0 0.0
          %1604 = vmatprep.subr.mxu0 0.0
          %1605 = vmatpush2.msra.mxu0 0.0
          %1606 = vmatprep.subr.mxu0 0.0
          %1607 = vmatpush2.msra.mxu0 0.0
          %1608 = vmatprep.subr.mxu0 0.0
          %1609 = vmatpush2.msra.mxu0 0.0
          %1610 = vmatprep.mubr.f32.mxu0 0.0
          %1611 = vmatmul.mubr.f32.gmra.mxu0 %v1541
          %v1612 = vpop.f32.mrf.mxu0
          %v1613 = vadd.f32 0.0, %v1612
          %v1614 = vpop.f32.mrf.mxu0
          %1615 = vmatprep.mubr.f32.mxu0 0.0
          %1616 = vmatmul.mubr.f32.gmra.mxu0 %v1544
          %v1617 = vpop.f32.mrf.mxu0
          %v1618 = vadd.f32 0.0, %v1617
          %v1619 = vpop.f32.mrf.mxu0
          %1620 = vdwg.mxu0
          %v1621 = vmul.f32 %v1613, %v365
          %v1622 = vmul.f32 %v1618, %v366
          %v1623 = vsel %vm369, %v1621, 0.0
          %v1624 = vsel %vm369, %v1622, 0.0
          %v1625 = vadd.f32 %v1623, %v1624
          %1626 = vadd.xlane.f32.xlu0 %v1625
          %v1627 = vpop.xlane.xlu0 %1626
          %v1628 = vrot.slane %v1627, 4
          %v1629 = vadd.f32 %v1627, %v1628
          %v1630 = vrot.slane %v1629, 2
          %v1631 = vadd.f32 %v1629, %v1630
          %v1632 = vrot.slane %v1631, 1
          %v1633 = vadd.f32 %v1631, %v1632
          %v1634 = vsub.f32 %v1633, 16.0
          %vm1635 = vcmask 0
          %1636 = vst.msk [vmem:[%s336] sm:$0x1] %vm1635, %v1634
        $region40: #{tpu_custom_call.1} parent=31 // pred_fallthru
          _
        %s1637 = smul.u32 %s23, 2
        %s1638 = sadd.s32 %s1637, %s24
        %s1639 = smul.u32 %s1638, 128
        %v1640 = vlaneseq
        %v1641 = vshrl.u32 %v1640, 7
        %v1642 = vadd.s32 %v1641, 8
        %v1643 = vadd.s32 %v1641, 16
        %v1644 = vadd.s32 %v1641, 24
        %v1645 = vadd.s32 %v1641, 32
        %v1646 = vadd.s32 %v1641, 40
        %v1647 = vadd.s32 %v1641, 48
        %v1648 = vadd.s32 %v1641, 56
        %v1649 = vadd.s32 %v1641, 64
        %v1650 = vadd.s32 %v1641, 72
        %v1651 = vadd.s32 %v1641, 80
        %v1652 = vadd.s32 %v1641, 88
        %v1653 = vadd.s32 %v1641, 96
        %v1654 = vadd.s32 %v1641, 104
        %v1655 = vadd.s32 %v1641, 112
        %v1656 = vadd.s32 %v1641, 120
        %v1657 = vstv %s1639
        %v1658 = vadd.s32 %v1657, %v1641
        %v1659 = vadd.s32 %v1657, %v1642
        %v1660 = vadd.s32 %v1657, %v1643
        %v1661 = vadd.s32 %v1657, %v1644
        %v1662 = vadd.s32 %v1657, %v1645
        %v1663 = vadd.s32 %v1657, %v1646
        %v1664 = vadd.s32 %v1657, %v1647
        %v1665 = vadd.s32 %v1657, %v1648
        %v1666 = vadd.s32 %v1657, %v1649
        %v1667 = vadd.s32 %v1657, %v1650
        %v1668 = vadd.s32 %v1657, %v1651
        %v1669 = vadd.s32 %v1657, %v1652
        %v1670 = vadd.s32 %v1657, %v1653
        %v1671 = vadd.s32 %v1657, %v1654
        %v1672 = vadd.s32 %v1657, %v1655
        %v1673 = vadd.s32 %v1657, %v1656
        %vm1674 = vcmp.lt.s32.totalorder %v1658, 500
        %vm1675 = vcmp.lt.s32.totalorder %v1659, 500
        %vm1676 = vcmp.lt.s32.totalorder %v1660, 500
        %vm1677 = vcmp.lt.s32.totalorder %v1661, 500
        %vm1678 = vcmp.lt.s32.totalorder %v1662, 500
        %vm1679 = vcmp.lt.s32.totalorder %v1663, 500
        %vm1680 = vcmp.lt.s32.totalorder %v1664, 500
        %vm1681 = vcmp.lt.s32.totalorder %v1665, 500
        %vm1682 = vcmp.lt.s32.totalorder %v1666, 500
        %vm1683 = vcmp.lt.s32.totalorder %v1667, 500
        %vm1684 = vcmp.lt.s32.totalorder %v1668, 500
        %vm1685 = vcmp.lt.s32.totalorder %v1669, 500
        %vm1686 = vcmp.lt.s32.totalorder %v1670, 500
        %vm1687 = vcmp.lt.s32.totalorder %v1671, 500
        %vm1688 = vcmp.lt.s32.totalorder %v1672, 500
        %vm1689 = vcmp.lt.s32.totalorder %v1673, 500
        %v1690 = vld [vmem:[%s324] sm:$0xff]
        %v1691 = vld [vmem:[%s324 + $0x8] sm:$0xff]
        %v1692 = vld [vmem:[%s324 + $0x10] sm:$0xff]
        %v1693 = vld [vmem:[%s324 + $0x18] sm:$0xff]
        %v1694 = vld [vmem:[%s324 + $0x20] sm:$0xff]
        %v1695 = vld [vmem:[%s324 + $0x28] sm:$0xff]
        %v1696 = vld [vmem:[%s324 + $0x30] sm:$0xff]
        %v1697 = vld [vmem:[%s324 + $0x38] sm:$0xff]
        %v1698 = vld [vmem:[%s324 + $0x40] sm:$0xff]
        %v1699 = vld [vmem:[%s324 + $0x48] sm:$0xff]
        %v1700 = vld [vmem:[%s324 + $0x50] sm:$0xff]
        %v1701 = vld [vmem:[%s324 + $0x58] sm:$0xff]
        %v1702 = vld [vmem:[%s324 + $0x60] sm:$0xff]
        %v1703 = vld [vmem:[%s324 + $0x68] sm:$0xff]
        %v1704 = vld [vmem:[%s324 + $0x70] sm:$0xff]
        %v1705 = vld [vmem:[%s324 + $0x78] sm:$0xff]
        %v1706 = vld [vmem:[%s302] sm:$0xff]
        %v1707 = vld [vmem:[%s302 + $0x8] sm:$0xff]
        %v1708 = vld [vmem:[%s302 + $0x10] sm:$0xff]
        %v1709 = vld [vmem:[%s302 + $0x18] sm:$0xff]
        %v1710 = vld [vmem:[%s302 + $0x20] sm:$0xff]
        %v1711 = vld [vmem:[%s302 + $0x28] sm:$0xff]
        %v1712 = vld [vmem:[%s302 + $0x30] sm:$0xff]
        %v1713 = vld [vmem:[%s302 + $0x38] sm:$0xff]
        %v1714 = vld [vmem:[%s302 + $0x40] sm:$0xff]
        %v1715 = vld [vmem:[%s302 + $0x48] sm:$0xff]
        %v1716 = vld [vmem:[%s302 + $0x50] sm:$0xff]
        %v1717 = vld [vmem:[%s302 + $0x58] sm:$0xff]
        %v1718 = vld [vmem:[%s302 + $0x60] sm:$0xff]
        %v1719 = vld [vmem:[%s302 + $0x68] sm:$0xff]
        %v1720 = vld [vmem:[%s302 + $0x70] sm:$0xff]
        %v1721 = vld [vmem:[%s302 + $0x78] sm:$0xff]
        %v1722 = vld [vmem:[%s2] sm:$0xff]
        %v1723 = vld [vmem:[%s2 + $0x8] sm:$0xff]
        %vm1724 = vcmask 130048
        %v1726 = vsel %vm1724, %v1706, 0
        %v1729 = vsel %vm1724, %v1707, 0
        %v1732 = vsel %vm1724, %v1708, 0
        %v1735 = vsel %vm1724, %v1709, 0
        %v1738 = vsel %vm1724, %v1710, 0
        %v1741 = vsel %vm1724, %v1711, 0
        %v1744 = vsel %vm1724, %v1712, 0
        %v1747 = vsel %vm1724, %v1713, 0
        %v1750 = vsel %vm1724, %v1714, 0
        %v1753 = vsel %vm1724, %v1715, 0
        %v1756 = vsel %vm1724, %v1716, 0
        %v1759 = vsel %vm1724, %v1717, 0
        %v1762 = vsel %vm1724, %v1718, 0
        %v1765 = vsel %vm1724, %v1719, 0
        %v1768 = vsel %vm1724, %v1720, 0
        %v1771 = vsel %vm1724, %v1721, 0
        %1773 = vmatprep.subr.mxu0 0.0
        %1774 = vmatpush1.msra.mxu0 0.0
        %1775 = vmatprep.subr.mxu0 0.0
        %1776 = vmatpush1.msra.mxu0 0.0
        %1777 = vmatprep.subr.mxu0 0.0
        %1778 = vmatpush1.msra.mxu0 0.0
        %1779 = vmatprep.subr.mxu0 0.0
        %1780 = vmatpush1.msra.mxu0 0.0
        %1781 = vmatprep.subr.mxu0 0.0
        %1782 = vmatpush1.msra.mxu0 0.0
        %1783 = vmatprep.subr.mxu0 0.0
        %1784 = vmatpush1.msra.mxu0 0.0
        %1785 = vmatprep.subr.mxu0 0.0
        %1786 = vmatpush1.msra.mxu0 0.0
        %1787 = vmatprep.subr.mxu0 0.0
        %1788 = vmatpush1.msra.mxu0 0.0
        %1789 = vmatprep.subr.mxu0 0.0
        %1790 = vmatpush1.msra.mxu0 0.0
        %1791 = vmatprep.subr.mxu0 0.0
        %1792 = vmatpush1.msra.mxu0 0.0
        %1793 = vmatprep.subr.mxu0 0.0
        %1794 = vmatpush1.msra.mxu0 0.0
        %1795 = vmatprep.subr.mxu0 0.0
        %1796 = vmatpush1.msra.mxu0 0.0
        %1797 = vmatprep.subr.mxu0 0.0
        %1798 = vmatpush1.msra.mxu0 0.0
        %1799 = vmatprep.subr.mxu0 0.0
        %1800 = vmatpush1.msra.mxu0 0.0
        %1801 = vmatprep.subr.mxu0 0.0
        %1802 = vmatpush1.msra.mxu0 %v1723
        %1803 = vmatprep.subr.mxu0 0.0
        %1804 = vmatpush1.msra.mxu0 %v1722
        %1805 = vmatprep.subr.mxu0 0.0
        %1806 = vmatpush2.msra.mxu0 0.0
        %1807 = vmatprep.subr.mxu0 0.0
        %1808 = vmatpush2.msra.mxu0 0.0
        %1809 = vmatprep.subr.mxu0 0.0
        %1810 = vmatpush2.msra.mxu0 0.0
        %1811 = vmatprep.subr.mxu0 0.0
        %1812 = vmatpush2.msra.mxu0 0.0
        %1813 = vmatprep.subr.mxu0 0.0
        %1814 = vmatpush2.msra.mxu0 0.0
        %1815 = vmatprep.subr.mxu0 0.0
        %1816 = vmatpush2.msra.mxu0 0.0
        %1817 = vmatprep.subr.mxu0 0.0
        %1818 = vmatpush2.msra.mxu0 0.0
        %1819 = vmatprep.subr.mxu0 0.0
        %1820 = vmatpush2.msra.mxu0 0.0
        %1821 = vmatprep.subr.mxu0 0.0
        %1822 = vmatpush2.msra.mxu0 0.0
        %1823 = vmatprep.subr.mxu0 0.0
        %1824 = vmatpush2.msra.mxu0 0.0
        %1825 = vmatprep.subr.mxu0 0.0
        %1826 = vmatpush2.msra.mxu0 0.0
        %1827 = vmatprep.subr.mxu0 0.0
        %1828 = vmatpush2.msra.mxu0 0.0
        %1829 = vmatprep.subr.mxu0 0.0
        %1830 = vmatpush2.msra.mxu0 0.0
        %1831 = vmatprep.subr.mxu0 0.0
        %1832 = vmatpush2.msra.mxu0 0.0
        %1833 = vmatprep.subr.mxu0 0.0
        %1834 = vmatpush2.msra.mxu0 0.0
        %1835 = vmatprep.subr.mxu0 0.0
        %1836 = vmatpush2.msra.mxu0 0.0
        %1837 = vmatprep.mubr.f32.mxu0 0.0
        %1838 = vmatmul.mubr.f32.gmra.mxu0 %v1726
        %v1839 = vpop.f32.mrf.mxu0
        %v1840 = vadd.f32 0.0, %v1839
        %v1841 = vpop.f32.mrf.mxu0
        %1842 = vmatprep.mubr.f32.mxu0 0.0
        %1843 = vmatmul.mubr.f32.gmra.mxu0 %v1729
        %v1844 = vpop.f32.mrf.mxu0
        %v1845 = vadd.f32 0.0, %v1844
        %v1846 = vpop.f32.mrf.mxu0
        %1847 = vmatprep.mubr.f32.mxu0 0.0
        %1848 = vmatmul.mubr.f32.gmra.mxu0 %v1732
        %v1849 = vpop.f32.mrf.mxu0
        %v1850 = vadd.f32 0.0, %v1849
        %v1851 = vpop.f32.mrf.mxu0
        %1852 = vmatprep.mubr.f32.mxu0 0.0
        %1853 = vmatmul.mubr.f32.gmra.mxu0 %v1735
        %v1854 = vpop.f32.mrf.mxu0
        %v1855 = vadd.f32 0.0, %v1854
        %v1856 = vpop.f32.mrf.mxu0
        %1857 = vmatprep.mubr.f32.mxu0 0.0
        %1858 = vmatmul.mubr.f32.gmra.mxu0 %v1738
        %v1859 = vpop.f32.mrf.mxu0
        %v1860 = vadd.f32 0.0, %v1859
        %v1861 = vpop.f32.mrf.mxu0
        %1862 = vmatprep.mubr.f32.mxu0 0.0
        %1863 = vmatmul.mubr.f32.gmra.mxu0 %v1741
        %v1864 = vpop.f32.mrf.mxu0
        %v1865 = vadd.f32 0.0, %v1864
        %v1866 = vpop.f32.mrf.mxu0
        %1867 = vmatprep.mubr.f32.mxu0 0.0
        %1868 = vmatmul.mubr.f32.gmra.mxu0 %v1744
        %v1869 = vpop.f32.mrf.mxu0
        %v1870 = vadd.f32 0.0, %v1869
        %v1871 = vpop.f32.mrf.mxu0
        %1872 = vmatprep.mubr.f32.mxu0 0.0
        %1873 = vmatmul.mubr.f32.gmra.mxu0 %v1747
        %v1874 = vpop.f32.mrf.mxu0
        %v1875 = vadd.f32 0.0, %v1874
        %v1876 = vpop.f32.mrf.mxu0
        %1877 = vmatprep.mubr.f32.mxu0 0.0
        %1878 = vmatmul.mubr.f32.gmra.mxu0 %v1750
        %v1879 = vpop.f32.mrf.mxu0
        %v1880 = vadd.f32 0.0, %v1879
        %v1881 = vpop.f32.mrf.mxu0
        %1882 = vmatprep.mubr.f32.mxu0 0.0
        %1883 = vmatmul.mubr.f32.gmra.mxu0 %v1753
        %v1884 = vpop.f32.mrf.mxu0
        %v1885 = vadd.f32 0.0, %v1884
        %v1886 = vpop.f32.mrf.mxu0
        %1887 = vmatprep.mubr.f32.mxu0 0.0
        %1888 = vmatmul.mubr.f32.gmra.mxu0 %v1756
        %v1889 = vpop.f32.mrf.mxu0
        %v1890 = vadd.f32 0.0, %v1889
        %v1891 = vpop.f32.mrf.mxu0
        %1892 = vmatprep.mubr.f32.mxu0 0.0
        %1893 = vmatmul.mubr.f32.gmra.mxu0 %v1759
        %v1894 = vpop.f32.mrf.mxu0
        %v1895 = vadd.f32 0.0, %v1894
        %v1896 = vpop.f32.mrf.mxu0
        %1897 = vmatprep.mubr.f32.mxu0 0.0
        %1898 = vmatmul.mubr.f32.gmra.mxu0 %v1762
        %v1899 = vpop.f32.mrf.mxu0
        %v1900 = vadd.f32 0.0, %v1899
        %v1901 = vpop.f32.mrf.mxu0
        %1902 = vmatprep.mubr.f32.mxu0 0.0
        %1903 = vmatmul.mubr.f32.gmra.mxu0 %v1765
        %v1904 = vpop.f32.mrf.mxu0
        %v1905 = vadd.f32 0.0, %v1904
        %v1906 = vpop.f32.mrf.mxu0
        %1907 = vmatprep.mubr.f32.mxu0 0.0
        %1908 = vmatmul.mubr.f32.gmra.mxu0 %v1768
        %v1909 = vpop.f32.mrf.mxu0
        %v1910 = vadd.f32 0.0, %v1909
        %v1911 = vpop.f32.mrf.mxu0
        %1912 = vmatprep.mubr.f32.mxu0 0.0
        %1913 = vmatmul.mubr.f32.gmra.mxu0 %v1771
        %v1914 = vpop.f32.mrf.mxu0
        %v1915 = vadd.f32 0.0, %v1914
        %v1916 = vpop.f32.mrf.mxu0
        %1917 = vdwg.mxu0
        %v1918 = vsub.f32 %v1690, %v1840
        %v1919 = vsub.f32 %v1691, %v1845
        %v1920 = vsub.f32 %v1692, %v1850
        %v1921 = vsub.f32 %v1693, %v1855
        %v1922 = vsub.f32 %v1694, %v1860
        %v1923 = vsub.f32 %v1695, %v1865
        %v1924 = vsub.f32 %v1696, %v1870
        %v1925 = vsub.f32 %v1697, %v1875
        %v1926 = vsub.f32 %v1698, %v1880
        %v1927 = vsub.f32 %v1699, %v1885
        %v1928 = vsub.f32 %v1700, %v1890
        %v1929 = vsub.f32 %v1701, %v1895
        %v1930 = vsub.f32 %v1702, %v1900
        %v1931 = vsub.f32 %v1703, %v1905
        %v1932 = vsub.f32 %v1704, %v1910
        %v1933 = vsub.f32 %v1705, %v1915
        %v1934 = vsel %vm1674, 1, 0
        %v1935 = vsel %vm1675, 1, 0
        %v1936 = vsel %vm1676, 1, 0
        %v1937 = vsel %vm1677, 1, 0
        %v1938 = vsel %vm1678, 1, 0
        %v1939 = vsel %vm1679, 1, 0
        %v1940 = vsel %vm1680, 1, 0
        %v1941 = vsel %vm1681, 1, 0
        %v1942 = vsel %vm1682, 1, 0
        %v1943 = vsel %vm1683, 1, 0
        %v1944 = vsel %vm1684, 1, 0
        %v1945 = vsel %vm1685, 1, 0
        %v1946 = vsel %vm1686, 1, 0
        %v1947 = vsel %vm1687, 1, 0
        %v1948 = vsel %vm1688, 1, 0
        %v1949 = vsel %vm1689, 1, 0
        %vm1950 = vcmp.eq.s32.totalorder %v1934, 1
        %vm1951 = vcmp.eq.s32.totalorder %v1935, 1
        %vm1952 = vcmp.eq.s32.totalorder %v1936, 1
        %vm1953 = vcmp.eq.s32.totalorder %v1937, 1
        %vm1954 = vcmp.eq.s32.totalorder %v1938, 1
        %vm1955 = vcmp.eq.s32.totalorder %v1939, 1
        %vm1956 = vcmp.eq.s32.totalorder %v1940, 1
        %vm1957 = vcmp.eq.s32.totalorder %v1941, 1
        %vm1958 = vcmp.eq.s32.totalorder %v1942, 1
        %vm1959 = vcmp.eq.s32.totalorder %v1943, 1
        %vm1960 = vcmp.eq.s32.totalorder %v1944, 1
        %vm1961 = vcmp.eq.s32.totalorder %v1945, 1
        %vm1962 = vcmp.eq.s32.totalorder %v1946, 1
        %vm1963 = vcmp.eq.s32.totalorder %v1947, 1
        %vm1964 = vcmp.eq.s32.totalorder %v1948, 1
        %vm1965 = vcmp.eq.s32.totalorder %v1949, 1
        %v1966 = vsel %vm1950, %v1918, 0.0
        %v1967 = vsel %vm1951, %v1919, 0.0
        %v1968 = vsel %vm1952, %v1920, 0.0
        %v1969 = vsel %vm1953, %v1921, 0.0
        %v1970 = vsel %vm1954, %v1922, 0.0
        %v1971 = vsel %vm1955, %v1923, 0.0
        %v1972 = vsel %vm1956, %v1924, 0.0
        %v1973 = vsel %vm1957, %v1925, 0.0
        %v1974 = vsel %vm1958, %v1926, 0.0
        %v1975 = vsel %vm1959, %v1927, 0.0
        %v1976 = vsel %vm1960, %v1928, 0.0
        %v1977 = vsel %vm1961, %v1929, 0.0
        %v1978 = vsel %vm1962, %v1930, 0.0
        %v1979 = vsel %vm1963, %v1931, 0.0
        %v1980 = vsel %vm1964, %v1932, 0.0
        %v1981 = vsel %vm1965, %v1933, 0.0
        %v1982 = vmul.f32 %v1966, %v1966
        %v1983 = vmul.f32 %v1967, %v1967
        %v1984 = vmul.f32 %v1968, %v1968
        %v1985 = vmul.f32 %v1969, %v1969
        %v1986 = vmul.f32 %v1970, %v1970
        %v1987 = vmul.f32 %v1971, %v1971
        %v1988 = vmul.f32 %v1972, %v1972
        %v1989 = vmul.f32 %v1973, %v1973
        %v1990 = vmul.f32 %v1974, %v1974
        %v1991 = vmul.f32 %v1975, %v1975
        %v1992 = vmul.f32 %v1976, %v1976
        %v1993 = vmul.f32 %v1977, %v1977
        %v1994 = vmul.f32 %v1978, %v1978
        %v1995 = vmul.f32 %v1979, %v1979
        %v1996 = vmul.f32 %v1980, %v1980
        %v1997 = vmul.f32 %v1981, %v1981
        %v1998 = vld [vmem:[%s284] sm:$0xff]
        %v1999 = vsel %vm1724, %v1982, 0.0
        %v2000 = vsel %vm1724, %v1983, 0.0
        %v2001 = vadd.f32 %v1999, %v2000
        %v2002 = vsel %vm1724, %v1984, 0.0
        %v2003 = vadd.f32 %v2001, %v2002
        %v2004 = vsel %vm1724, %v1985, 0.0
        %v2005 = vadd.f32 %v2003, %v2004
        %v2006 = vsel %vm1724, %v1986, 0.0
        %v2007 = vadd.f32 %v2005, %v2006
        %v2008 = vsel %vm1724, %v1987, 0.0
        %v2009 = vadd.f32 %v2007, %v2008
        %v2010 = vsel %vm1724, %v1988, 0.0
        %v2011 = vadd.f32 %v2009, %v2010
        %v2012 = vsel %vm1724, %v1989, 0.0
        %v2013 = vadd.f32 %v2011, %v2012
        %v2014 = vsel %vm1724, %v1990, 0.0
        %v2015 = vadd.f32 %v2013, %v2014
        %v2016 = vsel %vm1724, %v1991, 0.0
        %v2017 = vadd.f32 %v2015, %v2016
        %v2018 = vsel %vm1724, %v1992, 0.0
        %v2019 = vadd.f32 %v2017, %v2018
        %v2020 = vsel %vm1724, %v1993, 0.0
        %v2021 = vadd.f32 %v2019, %v2020
        %v2022 = vsel %vm1724, %v1994, 0.0
        %v2023 = vadd.f32 %v2021, %v2022
        %v2024 = vsel %vm1724, %v1995, 0.0
        %v2025 = vadd.f32 %v2023, %v2024
        %v2026 = vsel %vm1724, %v1996, 0.0
        %v2027 = vadd.f32 %v2025, %v2026
        %v2028 = vsel %vm1724, %v1997, 0.0
        %v2029 = vadd.f32 %v2027, %v2028
        %v2030 = vadd.f32 %v1998, %v2029
        %2031 = vst.msk [vmem:[%s284] sm:$0xff] %vm1724, %v2030
        %s2032 = sand.u32 %s128, 1
        %s2033 = scalar_lea.sflag [#allocation3], %s2032
        %s2034 = sand.u32 %s128, 1
        %s2035 = smul.addr %s2034, 8
        %s2036 = scalar_lea.vmem [#allocation2], %s2035
        %p2037 = scmp.lt.s32.totalorder %s23, 1
        %s2038 = scalar_select %p2037, %s23, 1
        %s2039 = scalar_lea.vmem %s4, %s2038
        // Predicated region
        $region41: #{tpu_custom_call.1} parent=31 // pred_check
          %p2040 = pneg %p138
        $region42: #{tpu_custom_call.1} parent=31 // pred_check_branch
          %2042 = sbr.rel (%p2040) target = $region44
        $region43: #{tpu_custom_call.1} parent=31 // pred_region
          %s2044 = ssub.s32 128, 128
          %2045 = vsyncadd %s2033, %s2044
          %s2046 = smul.addr %s23, 128
          %s2047 = scalar_lea.hbm %s3, %s2046
          %s2049 = sshll.u32 %s2036, 4
          %s2050 = int_to_ptr.vmem [resolvable:$true] %s2049
          %2052 = dma.vmem_to_hbm [thread:$0]  %s2050, 128, %s2047, %s2033
        $region44: #{tpu_custom_call.1} parent=31 // pred_fallthru
          _
        // Predicated region
        $region45: #{tpu_custom_call.1} parent=31 // pred_check
          %p2053 = pneg %p164
        $region46: #{tpu_custom_call.1} parent=31 // pred_check_branch
          %2055 = sbr.rel (%p2053) target = $region48
        $region47: #{tpu_custom_call.1} parent=31 // pred_region
          _
        $region48: #{tpu_custom_call.1} parent=31 // pred_fallthru
          _
      $region32: #{tpu_custom_call.1} parent=5 // pred_fallthru
        _
      %p2056 = scmp.le.s32.totalorder 2, %s14
      // Predicated region
      $region49: #{tpu_custom_call.1} parent=5 // pred_check
        %p2057 = pneg %p2056
      $region50: #{tpu_custom_call.1} parent=5 // pred_check_branch
        %2059 = sbr.rel (%p2057) target = $region52
      $region51: #{tpu_custom_call.1} parent=5 // pred_region
        %s2060 = ssub.s32 %s14, 2
        // Predicated region
        $region53: #{tpu_custom_call.1} parent=51 // pred_check
          %p2061 = pneg %p144
        $region54: #{tpu_custom_call.1} parent=51 // pred_check_branch
          %2063 = sbr.rel (%p2061) target = $region56
        $region55: #{tpu_custom_call.1} parent=51 // pred_region
          %s2064 = sand.u32 %s129, 1
          %s2065 = scalar_lea.sflag [#allocation3], %s2064
          %s2066 = sand.u32 %s129, 1
          %s2067 = smul.addr %s2066, 8
          %s2068 = scalar_lea.vmem [#allocation2], %s2067
          %2069 = dma.done %s2065, 128
        $region56: #{tpu_custom_call.1} parent=51 // pred_fallthru
          _
        // Predicated region
        $region57: #{tpu_custom_call.1} parent=51 // pred_check
          %p2070 = pneg %p170
        $region58: #{tpu_custom_call.1} parent=51 // pred_check_branch
          %2072 = sbr.rel (%p2070) target = $region60
        $region59: #{tpu_custom_call.1} parent=51 // pred_region
          %p2073 = scmp.lt.s32.totalorder %s25, 1
          %s2074 = scalar_select %p2073, %s25, 1
          %s2075 = scalar_lea.vmem %s4, %s2074
        $region60: #{tpu_custom_call.1} parent=51 // pred_fallthru
          _
      $region52: #{tpu_custom_call.1} parent=5 // pred_fallthru
        _
    $region6: #{tpu_custom_call.1} parent=1 // loop_footer
      %s18 = sadd.s32 1, %s14
    $region7: #{tpu_custom_call.1} parent=1 // loop_footer_branch
      %13 = sbr.rel target = $region3
    $region8: #{tpu_custom_call.1} parent=1 // loop_exit
      _
    %2076 = vsyncpa [#allocation3], 1
    %s2077 = scalar_lea.sflag [#allocation3], 1
    %2078 = vsyncpa %s2077, 1

</llo_original>
